<compile_context>
chip_gen: v7x
topology: tpu7x:2x2x1
jax: 0.10.0
libtpu: 0.0.40
codegen_flags: <defaults>
</compile_context>

<pallas_src>
import functools

import jax
import jax.numpy as jnp
from jax.experimental import pallas as pl

FEAT_DIM = 32   # encoder output dim D
HID_DIM = 32    # encoder hidden dim
PROJ_HID = 32   # projector / predictor hidden dim
PROJ_OUT = 32   # projector / predictor output dim


# ----------------------------- Pallas kernels ------------------------------

def _encoder_kernel(x_ref, w1_ref, b1_ref, w2_ref, b2_ref, gf_ref, pf_ref,
                    *, n_clouds, n_points, patch_num):
    """Flattened point-wise MLP over all clouds + global/per-patch max-pool.

    x_ref: (n_clouds * n_points, Cin)  -- all points of all clouds, one big-M matmul.
    gf_ref: (n_clouds, D)              -- per-cloud global max.
    pf_ref: (n_clouds * patch_num, D)  -- per-patch max (contiguous point split).
    """
    x = x_ref[...]
    h = jnp.dot(x, w1_ref[...], preferred_element_type=jnp.float32) + b1_ref[...]
    h = jnp.maximum(h, 0.0)
    f = jnp.dot(h, w2_ref[...], preferred_element_type=jnp.float32) + b2_ref[...]
    f = jnp.maximum(f, 0.0)                                         # (M*N, D)

    d = f.shape[-1]
    npp = n_points // patch_num
    # Segment maxes from the SAME per-point feature tensor (no recompute).
    pf_ref[...] = jnp.max(f.reshape(n_clouds * patch_num, npp, d), axis=1)
    gf_ref[...] = jnp.max(f.reshape(n_clouds, n_points, d), axis=1)


def _attn_core(gf, pf, wq, wk, wv, wo, pw1, pb1, pw2, pb2, patch_num):
    """Batched cross-attention (block-diagonal mask trick) + projector MLP.

    gf: (M, D) queries (one per cloud), pf: (M*P, D) keys/values (P patches per cloud).
    """
    q = jnp.dot(gf, wq, preferred_element_type=jnp.float32)          # (M, D)
    k = jnp.dot(pf, wk, preferred_element_type=jnp.float32)          # (M*P, D)
    v = jnp.dot(pf, wv, preferred_element_type=jnp.float32)          # (M*P, D)

    d = q.shape[-1]
    # Dense scores (M, M*P); mask out cross-sample entries (static block-diag mask).
    s = jax.lax.dot_general(q, k, (((1,), (1,)), ((), ())),
                            preferred_element_type=jnp.float32) * (1.0 / (d ** 0.5))
    row = jax.lax.broadcasted_iota(jnp.int32, s.shape, 0)
    col = jax.lax.broadcasted_iota(jnp.int32, s.shape, 1)
    mask = (col >= row * patch_num) & (col < (row + 1) * patch_num)
    s = jnp.where(mask, s, -jnp.inf)

    s = s - jnp.max(s, axis=-1, keepdims=True)
    e = jnp.exp(s)
    p = e * pl.reciprocal(jnp.sum(e, axis=-1, keepdims=True), approx=True)
    att = jnp.dot(p, v, preferred_element_type=jnp.float32)          # (M, D)
    a = gf + jnp.dot(att, wo, preferred_element_type=jnp.float32)    # residual

    # projector: Linear -> ReLU -> Linear
    h = jnp.maximum(jnp.dot(a, pw1, preferred_element_type=jnp.float32) + pb1, 0.0)
    return jnp.dot(h, pw2, preferred_element_type=jnp.float32) + pb2


def _attn_proj_kernel(gf_ref, pf_ref, wq_ref, wk_ref, wv_ref, wo_ref,
                      pw1_ref, pb1_ref, pw2_ref, pb2_ref, o_ref, *, patch_num):
    """Target branch: cross-attn + projector, whole batch in one call."""
    o_ref[...] = _attn_core(gf_ref[...], pf_ref[...],
                            wq_ref[...], wk_ref[...], wv_ref[...], wo_ref[...],
                            pw1_ref[...], pb1_ref[...], pw2_ref[...], pb2_ref[...],
                            patch_num)


def _attn_proj_pred_kernel(gf_ref, pf_ref, wq_ref, wk_ref, wv_ref, wo_ref,
                           pw1_ref, pb1_ref, pw2_ref, pb2_ref,
                           qw1_ref, qb1_ref, qw2_ref, qb2_ref, o_ref, *, patch_num):
    """Online branch: cross-attn + projector + predictor, whole batch in one call."""
    z = _attn_core(gf_ref[...], pf_ref[...],
                   wq_ref[...], wk_ref[...], wv_ref[...], wo_ref[...],
                   pw1_ref[...], pb1_ref[...], pw2_ref[...], pb2_ref[...],
                   patch_num)
    h = jnp.maximum(jnp.dot(z, qw1_ref[...], preferred_element_type=jnp.float32)
                    + qb1_ref[...], 0.0)
    o_ref[...] = jnp.dot(h, qw2_ref[...], preferred_element_type=jnp.float32) + qb2_ref[...]


# ----------------------------- kernel wrappers ------------------------------

def encode_batch(points, enc_params, patch_num):
    """points: (M, N, Cin) -> (gf (M, D), pf (M*patch_num, D)). Single grid-less call."""
    w1, b1, w2, b2 = enc_params
    M, N, C = points.shape
    x = points.reshape(M * N, C)
    kernel = functools.partial(_encoder_kernel, n_clouds=M, n_points=N,
                               patch_num=patch_num)
    gf, pf = pl.pallas_call(
        kernel,
        out_shape=(jax.ShapeDtypeStruct((M, FEAT_DIM), jnp.float32),
                   jax.ShapeDtypeStruct((M * patch_num, FEAT_DIM), jnp.float32)),
    )(x, w1, b1, w2, b2)
    return gf, pf


def attn_proj(gf, pf, attn_params, proj_params, pred_params, patch_num):
    """gf: (M, D), pf: (M*P, D) -> (M, PROJ_OUT).  pred_params=None -> target branch."""
    M = gf.shape[0]
    if pred_params is None:
        kernel = functools.partial(_attn_proj_kernel, patch_num=patch_num)
        args = (gf, pf, *attn_params, *proj_params)
    else:
        kernel = functools.partial(_attn_proj_pred_kernel, patch_num=patch_num)
        args = (gf, pf, *attn_params, *proj_params, *pred_params)
    return pl.pallas_call(
        kernel,
        out_shape=jax.ShapeDtypeStruct((M, PROJ_OUT), jnp.float32),
    )(*args)


# ----------------------------- model glue (plain JAX) ------------------------------

def momentum_update(online, target, m=0.99):
    """First call: target <- copy(online). Subsequent calls: EMA."""
    if target is None:
        return jax.tree_util.tree_map(lambda p: p, online)
    return jax.tree_util.tree_map(lambda t, o: m * t + (1.0 - m) * o, target, online)


def loss_fn(p, z):
    """Negative cosine similarity (SimSiam style): per-sample 2 - 2 * cos(p, z)."""
    p = p / (jnp.linalg.norm(p, axis=-1, keepdims=True) + 1e-12)
    z = z / (jnp.linalg.norm(z, axis=-1, keepdims=True) + 1e-12)
    return 2.0 - 2.0 * jnp.sum(p * jax.lax.stop_gradient(z), axis=-1)


def sim_attention_3_forward(aug1, aug2, online_params, target_params, patch_num):
    B = aug1.shape[0]
    # Batch everything that shares parameters: one encoder call per param set.
    online_in = jnp.concatenate([aug1, aug2], axis=0)   # rows [0:B]=branch1, [B:2B]=branch2
    target_in = jnp.concatenate([aug2, aug1], axis=0)   # rows [0:B]=branch1, [B:2B]=branch2

    gf_on, pf_on = encode_batch(online_in, online_params["encoder"], patch_num)
    gf_tg, pf_tg = encode_batch(target_in, target_params["encoder"], patch_num)

    # One fused attn+projector(+predictor) call per param set, whole stacked batch.
    p_all = attn_proj(gf_on, pf_on, online_params["attn"], online_params["projector"],
                      online_params["predictor"], patch_num)                   # (2B, Dout)
    z_all = jax.lax.stop_gradient(
        attn_proj(gf_tg, pf_tg, target_params["attn"], target_params["projector"],
                  None, patch_num))                                            # (2B, Dout)

    loss_1 = loss_fn(p_all[:B], z_all[:B])
    loss_2 = loss_fn(p_all[B:], z_all[B:])
    loss = loss_1 + loss_2
    return loss.mean()


# ----------------------------- parameter init ------------------------------

def init_linear(key, fan_in, fan_out):
    kw, _ = jax.random.split(key)
    w = jax.random.normal(kw, (fan_in, fan_out), jnp.float32) / jnp.sqrt(float(fan_in))
    b = jnp.zeros((1, fan_out), jnp.float32)
    return w, b


def init_online_params(key, c_in):
    keys = jax.random.split(key, 10)
    enc_w1, enc_b1 = init_linear(keys[0], c_in, HID_DIM)
    enc_w2, enc_b2 = init_linear(keys[1], HID_DIM, FEAT_DIM)
    wq, _ = init_linear(keys[2], FEAT_DIM, FEAT_DIM)
    wk, _ = init_linear(keys[3], FEAT_DIM, FEAT_DIM)
    wv, _ = init_linear(keys[4], FEAT_DIM, FEAT_DIM)
    wo, _ = init_linear(keys[5], FEAT_DIM, FEAT_DIM)
    proj_w1, proj_b1 = init_linear(keys[6], FEAT_DIM, PROJ_HID)
    proj_w2, proj_b2 = init_linear(keys[7], PROJ_HID, PROJ_OUT)
    pred_w1, pred_b1 = init_linear(keys[8], PROJ_OUT, PROJ_HID)
    pred_w2, pred_b2 = init_linear(keys[9], PROJ_HID, PROJ_OUT)
    return {
        "encoder": (enc_w1, enc_b1, enc_w2, enc_b2),
        "attn": (wq, wk, wv, wo),
        "projector": (proj_w1, proj_b1, proj_w2, proj_b2),
        "predictor": (pred_w1, pred_b1, pred_w2, pred_b2),
    }


# ----------------------------- main ------------------------------

if __name__ == "__main__":
    B, N, C = 2, 64, 3
    PATCH_NUM = 4

    key = jax.random.PRNGKey(0)
    k1, k2 = jax.random.split(key)
    aug1 = jax.random.normal(k1, (B, N, C), jnp.float32)
    aug2 = jax.random.normal(k2, (B, N, C), jnp.float32)

    online_params = init_online_params(jax.random.PRNGKey(42), C)

    # momentum_update with target=None -> deep copy of online (as in the PyTorch module's
    # first forward call); target branch has encoder/projector/attn but NO predictor.
    target_params = {
        "encoder": momentum_update(online_params["encoder"], None),
        "projector": momentum_update(online_params["projector"], None),
        "attn": momentum_update(online_params["attn"], None),
    }

    fwd = jax.jit(functools.partial(sim_attention_3_forward, patch_num=PATCH_NUM))
    loss = fwd(aug1, aug2, online_params, target_params)
    jax.block_until_ready(loss)
    assert loss.shape == () and jnp.isfinite(loss), loss
    print("KERNEL_OK")
</pallas_src>

<mosaic_0001>
module attributes {stable_mosaic.version = 11 : i64} {
  func.func @_encoder_kernel(%arg0: memref<256x3xf32, #tpu.memory_space<vmem>>, %arg1: memref<3x32xf32, #tpu.memory_space<vmem>>, %arg2: memref<1x32xf32, #tpu.memory_space<vmem>>, %arg3: memref<32x32xf32, #tpu.memory_space<vmem>>, %arg4: memref<1x32xf32, #tpu.memory_space<vmem>>, %arg5: memref<4x32xf32, #tpu.memory_space<vmem>>, %arg6: memref<16x32xf32, #tpu.memory_space<vmem>>) attributes {dimension_semantics = [], scalar_prefetch = 0 : i64, scratch_operands = 0 : i64, tpu.core_type = #tpu.core_type<tc>} {
    %c0 = arith.constant 0 : index
    %c0_0 = arith.constant 0 : index
    %0 = vector.load %arg0[%c0, %c0_0] : memref<256x3xf32, #tpu.memory_space<vmem>>, vector<256x3xf32>
    %c0_1 = arith.constant 0 : index
    %c0_2 = arith.constant 0 : index
    %1 = vector.load %arg1[%c0_1, %c0_2] : memref<3x32xf32, #tpu.memory_space<vmem>>, vector<3x32xf32>
    %cst = arith.constant dense<0.000000e+00> : vector<256x32xf32>
    %2 = tpu.matmul %0, %1, %cst {dimension_numbers = #tpu.dot_dimension_numbers<[1], [0], [0], [1], [0, 0, 1, 1], [], []>} : vector<256x3xf32>, vector<3x32xf32>, vector<256x32xf32> -> vector<256x32xf32>
    %c0_3 = arith.constant 0 : index
    %c0_4 = arith.constant 0 : index
    %3 = vector.load %arg2[%c0_3, %c0_4] : memref<1x32xf32, #tpu.memory_space<vmem>>, vector<1x32xf32>
    %4 = vector.broadcast %3 : vector<1x32xf32> to vector<256x32xf32>
    %5 = arith.addf %2, %4 : vector<256x32xf32>
    %cst_5 = arith.constant 0.000000e+00 : f32
    %6 = vector.broadcast %cst_5 : f32 to vector<256x32xf32>
    %7 = arith.maximumf %5, %6 : vector<256x32xf32>
    %c0_6 = arith.constant 0 : index
    %c0_7 = arith.constant 0 : index
    %8 = vector.load %arg3[%c0_6, %c0_7] : memref<32x32xf32, #tpu.memory_space<vmem>>, vector<32x32xf32>
    %cst_8 = arith.constant dense<0.000000e+00> : vector<256x32xf32>
    %9 = tpu.matmul %7, %8, %cst_8 {dimension_numbers = #tpu.dot_dimension_numbers<[1], [0], [0], [1], [0, 0, 1, 1], [], []>} : vector<256x32xf32>, vector<32x32xf32>, vector<256x32xf32> -> vector<256x32xf32>
    %c0_9 = arith.constant 0 : index
    %c0_10 = arith.constant 0 : index
    %10 = vector.load %arg4[%c0_9, %c0_10] : memref<1x32xf32, #tpu.memory_space<vmem>>, vector<1x32xf32>
    %11 = vector.broadcast %10 : vector<1x32xf32> to vector<256x32xf32>
    %12 = arith.addf %9, %11 : vector<256x32xf32>
    %cst_11 = arith.constant 0.000000e+00 : f32
    %13 = vector.broadcast %cst_11 : f32 to vector<256x32xf32>
    %14 = arith.maximumf %12, %13 : vector<256x32xf32>
    %15 = vector.shape_cast %14 : vector<256x32xf32> to vector<16x16x32xf32>
    %cst_12 = arith.constant dense<0xFF800000> : vector<16x32xf32>
    %16 = vector.multi_reduction <maximumf>, %15, %cst_12 [1] : vector<16x16x32xf32> to vector<16x32xf32>
    %c0_13 = arith.constant 0 : index
    %c0_14 = arith.constant 0 : index
    %17 = vector.load %arg6[%c0_13, %c0_14] : memref<16x32xf32, #tpu.memory_space<vmem>>, vector<16x32xf32>
    tpu.vector_store %arg6[%c0_13, %c0_14], %16 {strides = array<i32>} : memref<16x32xf32, #tpu.memory_space<vmem>>, vector<16x32xf32>,
    %18 = vector.shape_cast %14 : vector<256x32xf32> to vector<4x64x32xf32>
    %cst_15 = arith.constant dense<0xFF800000> : vector<4x32xf32>
    %19 = vector.multi_reduction <maximumf>, %18, %cst_15 [1] : vector<4x64x32xf32> to vector<4x32xf32>
    %c0_16 = arith.constant 0 : index
    %c0_17 = arith.constant 0 : index
    %20 = vector.load %arg5[%c0_16, %c0_17] : memref<4x32xf32, #tpu.memory_space<vmem>>, vector<4x32xf32>
    tpu.vector_store %arg5[%c0_16, %c0_17], %19 {strides = array<i32>} : memref<4x32xf32, #tpu.memory_space<vmem>>, vector<4x32xf32>,
    return
  }
}

module attributes {stable_mosaic.version = 11 : i64} {
  func.func @_attn_proj_pred_kernel(%arg0: memref<4x32xf32, #tpu.memory_space<vmem>>, %arg1: memref<16x32xf32, #tpu.memory_space<vmem>>, %arg2: memref<32x32xf32, #tpu.memory_space<vmem>>, %arg3: memref<32x32xf32, #tpu.memory_space<vmem>>, %arg4: memref<32x32xf32, #tpu.memory_space<vmem>>, %arg5: memref<32x32xf32, #tpu.memory_space<vmem>>, %arg6: memref<32x32xf32, #tpu.memory_space<vmem>>, %arg7: memref<1x32xf32, #tpu.memory_space<vmem>>, %arg8: memref<32x32xf32, #tpu.memory_space<vmem>>, %arg9: memref<1x32xf32, #tpu.memory_space<vmem>>, %arg10: memref<32x32xf32, #tpu.memory_space<vmem>>, %arg11: memref<1x32xf32, #tpu.memory_space<vmem>>, %arg12: memref<32x32xf32, #tpu.memory_space<vmem>>, %arg13: memref<1x32xf32, #tpu.memory_space<vmem>>, %arg14: memref<4x32xf32, #tpu.memory_space<vmem>>) attributes {dimension_semantics = [], scalar_prefetch = 0 : i64, scratch_operands = 0 : i64, tpu.core_type = #tpu.core_type<tc>} {
    %c0 = arith.constant 0 : index
    %c0_0 = arith.constant 0 : index
    %0 = vector.load %arg0[%c0, %c0_0] : memref<4x32xf32, #tpu.memory_space<vmem>>, vector<4x32xf32>
    %c0_1 = arith.constant 0 : index
    %c0_2 = arith.constant 0 : index
    %1 = vector.load %arg1[%c0_1, %c0_2] : memref<16x32xf32, #tpu.memory_space<vmem>>, vector<16x32xf32>
    %c0_3 = arith.constant 0 : index
    %c0_4 = arith.constant 0 : index
    %2 = vector.load %arg2[%c0_3, %c0_4] : memref<32x32xf32, #tpu.memory_space<vmem>>, vector<32x32xf32>
    %c0_5 = arith.constant 0 : index
    %c0_6 = arith.constant 0 : index
    %3 = vector.load %arg3[%c0_5, %c0_6] : memref<32x32xf32, #tpu.memory_space<vmem>>, vector<32x32xf32>
    %c0_7 = arith.constant 0 : index
    %c0_8 = arith.constant 0 : index
    %4 = vector.load %arg4[%c0_7, %c0_8] : memref<32x32xf32, #tpu.memory_space<vmem>>, vector<32x32xf32>
    %c0_9 = arith.constant 0 : index
    %c0_10 = arith.constant 0 : index
    %5 = vector.load %arg5[%c0_9, %c0_10] : memref<32x32xf32, #tpu.memory_space<vmem>>, vector<32x32xf32>
    %c0_11 = arith.constant 0 : index
    %c0_12 = arith.constant 0 : index
    %6 = vector.load %arg6[%c0_11, %c0_12] : memref<32x32xf32, #tpu.memory_space<vmem>>, vector<32x32xf32>
    %c0_13 = arith.constant 0 : index
    %c0_14 = arith.constant 0 : index
    %7 = vector.load %arg7[%c0_13, %c0_14] : memref<1x32xf32, #tpu.memory_space<vmem>>, vector<1x32xf32>
    %c0_15 = arith.constant 0 : index
    %c0_16 = arith.constant 0 : index
    %8 = vector.load %arg8[%c0_15, %c0_16] : memref<32x32xf32, #tpu.memory_space<vmem>>, vector<32x32xf32>
    %c0_17 = arith.constant 0 : index
    %c0_18 = arith.constant 0 : index
    %9 = vector.load %arg9[%c0_17, %c0_18] : memref<1x32xf32, #tpu.memory_space<vmem>>, vector<1x32xf32>
    %cst = arith.constant dense<0.000000e+00> : vector<4x32xf32>
    %10 = tpu.matmul %0, %2, %cst {dimension_numbers = #tpu.dot_dimension_numbers<[1], [0], [0], [1], [0, 0, 1, 1], [], []>} : vector<4x32xf32>, vector<32x32xf32>, vector<4x32xf32> -> vector<4x32xf32>
    %cst_19 = arith.constant dense<0.000000e+00> : vector<16x32xf32>
    %11 = tpu.matmul %1, %3, %cst_19 {dimension_numbers = #tpu.dot_dimension_numbers<[1], [0], [0], [1], [0, 0, 1, 1], [], []>} : vector<16x32xf32>, vector<32x32xf32>, vector<16x32xf32> -> vector<16x32xf32>
    %cst_20 = arith.constant dense<0.000000e+00> : vector<16x32xf32>
    %12 = tpu.matmul %1, %4, %cst_20 {dimension_numbers = #tpu.dot_dimension_numbers<[1], [0], [0], [1], [0, 0, 1, 1], [], []>} : vector<16x32xf32>, vector<32x32xf32>, vector<16x32xf32> -> vector<16x32xf32>
    %cst_21 = arith.constant dense<0.000000e+00> : vector<4x16xf32>
    %13 = tpu.matmul %10, %11, %cst_21 {dimension_numbers = #tpu.dot_dimension_numbers<[1], [1], [0], [0], [0, 0, 1, 0], [], []>} : vector<4x32xf32>, vector<16x32xf32>, vector<4x16xf32> -> vector<4x16xf32>
    %cst_22 = arith.constant 0.176776692 : f32
    %14 = vector.broadcast %cst_22 : f32 to vector<4x16xf32>
    %15 = arith.mulf %13, %14 : vector<4x16xf32>
    %16 = tpu.iota {dimensions = array<i32: 0>} : vector<4x16xi32>
    %17 = tpu.iota {dimensions = array<i32: 1>} : vector<4x16xi32>
    %c4_i32 = arith.constant 4 : i32
    %18 = vector.broadcast %c4_i32 : i32 to vector<4x16xi32>
    %19 = arith.muli %16, %18 : vector<4x16xi32>
    %20 = arith.cmpi sge, %17, %19 : vector<4x16xi32>
    %c1_i32 = arith.constant 1 : i32
    %21 = vector.broadcast %c1_i32 : i32 to vector<4x16xi32>
    %22 = arith.addi %16, %21 : vector<4x16xi32>
    %c4_i32_23 = arith.constant 4 : i32
    %23 = vector.broadcast %c4_i32_23 : i32 to vector<4x16xi32>
    %24 = arith.muli %22, %23 : vector<4x16xi32>
    %25 = arith.cmpi slt, %17, %24 : vector<4x16xi32>
    %26 = arith.andi %20, %25 : vector<4x16xi1>
    %cst_24 = arith.constant 0xFF800000 : f32
    %27 = vector.broadcast %cst_24 : f32 to vector<4x16xf32>
    %28 = arith.select %26, %15, %27 : vector<4x16xi1>, vector<4x16xf32>
    %cst_25 = arith.constant dense<0xFF800000> : vector<4xf32>
    %29 = vector.multi_reduction <maximumf>, %28, %cst_25 [1] : vector<4x16xf32> to vector<4xf32>
    %30 = vector.shape_cast %29 : vector<4xf32> to vector<4x1xf32>
    %31 = vector.broadcast %30 : vector<4x1xf32> to vector<4x16xf32>
    %32 = arith.subf %28, %31 : vector<4x16xf32>
    %33 = math.exp %32 : vector<4x16xf32>
    %cst_26 = arith.constant dense<0.000000e+00> : vector<4xf32>
    %34 = vector.multi_reduction <add>, %33, %cst_26 [1] : vector<4x16xf32> to vector<4xf32>
    %35 = vector.shape_cast %34 : vector<4xf32> to vector<4x1xf32>
    %36 = tpu.reciprocal %35 {approx = true} : vector<4x1xf32> -> vector<4x1xf32>
    %37 = vector.broadcast %36 : vector<4x1xf32> to vector<4x16xf32>
    %38 = arith.mulf %33, %37 : vector<4x16xf32>
    %cst_27 = arith.constant dense<0.000000e+00> : vector<4x32xf32>
    %39 = tpu.matmul %38, %12, %cst_27 {dimension_numbers = #tpu.dot_dimension_numbers<[1], [0], [0], [1], [0, 0, 1, 1], [], []>} : vector<4x16xf32>, vector<16x32xf32>, vector<4x32xf32> -> vector<4x32xf32>
    %cst_28 = arith.constant dense<0.000000e+00> : vector<4x32xf32>
    %40 = tpu.matmul %39, %5, %cst_28 {dimension_numbers = #tpu.dot_dimension_numbers<[1], [0], [0], [1], [0, 0, 1, 1], [], []>} : vector<4x32xf32>, vector<32x32xf32>, vector<4x32xf32> -> vector<4x32xf32>
    %41 = arith.addf %0, %40 : vector<4x32xf32>
    %cst_29 = arith.constant dense<0.000000e+00> : vector<4x32xf32>
    %42 = tpu.matmul %41, %6, %cst_29 {dimension_numbers = #tpu.dot_dimension_numbers<[1], [0], [0], [1], [0, 0, 1, 1], [], []>} : vector<4x32xf32>, vector<32x32xf32>, vector<4x32xf32> -> vector<4x32xf32>
    %43 = vector.broadcast %7 : vector<1x32xf32> to vector<4x32xf32>
    %44 = arith.addf %42, %43 : vector<4x32xf32>
    %cst_30 = arith.constant 0.000000e+00 : f32
    %45 = vector.broadcast %cst_30 : f32 to vector<4x32xf32>
    %46 = arith.maximumf %44, %45 : vector<4x32xf32>
    %cst_31 = arith.constant dense<0.000000e+00> : vector<4x32xf32>
    %47 = tpu.matmul %46, %8, %cst_31 {dimension_numbers = #tpu.dot_dimension_numbers<[1], [0], [0], [1], [0, 0, 1, 1], [], []>} : vector<4x32xf32>, vector<32x32xf32>, vector<4x32xf32> -> vector<4x32xf32>
    %48 = vector.broadcast %9 : vector<1x32xf32> to vector<4x32xf32>
    %49 = arith.addf %47, %48 : vector<4x32xf32>
    %c0_32 = arith.constant 0 : index
    %c0_33 = arith.constant 0 : index
    %50 = vector.load %arg10[%c0_32, %c0_33] : memref<32x32xf32, #tpu.memory_space<vmem>>, vector<32x32xf32>
    %cst_34 = arith.constant dense<0.000000e+00> : vector<4x32xf32>
    %51 = tpu.matmul %49, %50, %cst_34 {dimension_numbers = #tpu.dot_dimension_numbers<[1], [0], [0], [1], [0, 0, 1, 1], [], []>} : vector<4x32xf32>, vector<32x32xf32>, vector<4x32xf32> -> vector<4x32xf32>
    %c0_35 = arith.constant 0 : index
    %c0_36 = arith.constant 0 : index
    %52 = vector.load %arg11[%c0_35, %c0_36] : memref<1x32xf32, #tpu.memory_space<vmem>>, vector<1x32xf32>
    %53 = vector.broadcast %52 : vector<1x32xf32> to vector<4x32xf32>
    %54 = arith.addf %51, %53 : vector<4x32xf32>
    %cst_37 = arith.constant 0.000000e+00 : f32
    %55 = vector.broadcast %cst_37 : f32 to vector<4x32xf32>
    %56 = arith.maximumf %54, %55 : vector<4x32xf32>
    %c0_38 = arith.constant 0 : index
    %c0_39 = arith.constant 0 : index
    %57 = vector.load %arg12[%c0_38, %c0_39] : memref<32x32xf32, #tpu.memory_space<vmem>>, vector<32x32xf32>
    %cst_40 = arith.constant dense<0.000000e+00> : vector<4x32xf32>
    %58 = tpu.matmul %56, %57, %cst_40 {dimension_numbers = #tpu.dot_dimension_numbers<[1], [0], [0], [1], [0, 0, 1, 1], [], []>} : vector<4x32xf32>, vector<32x32xf32>, vector<4x32xf32> -> vector<4x32xf32>
    %c0_41 = arith.constant 0 : index
    %c0_42 = arith.constant 0 : index
    %59 = vector.load %arg13[%c0_41, %c0_42] : memref<1x32xf32, #tpu.memory_space<vmem>>, vector<1x32xf32>
    %60 = vector.broadcast %59 : vector<1x32xf32> to vector<4x32xf32>
    %61 = arith.addf %58, %60 : vector<4x32xf32>
    %c0_43 = arith.constant 0 : index
    %c0_44 = arith.constant 0 : index
    %62 = vector.load %arg14[%c0_43, %c0_44] : memref<4x32xf32, #tpu.memory_space<vmem>>, vector<4x32xf32>
    tpu.vector_store %arg14[%c0_43, %c0_44], %61 {strides = array<i32>} : memref<4x32xf32, #tpu.memory_space<vmem>>, vector<4x32xf32>,
    return
  }
}

module attributes {stable_mosaic.version = 11 : i64} {
  func.func @_attn_proj_kernel(%arg0: memref<4x32xf32, #tpu.memory_space<vmem>>, %arg1: memref<16x32xf32, #tpu.memory_space<vmem>>, %arg2: memref<32x32xf32, #tpu.memory_space<vmem>>, %arg3: memref<32x32xf32, #tpu.memory_space<vmem>>, %arg4: memref<32x32xf32, #tpu.memory_space<vmem>>, %arg5: memref<32x32xf32, #tpu.memory_space<vmem>>, %arg6: memref<32x32xf32, #tpu.memory_space<vmem>>, %arg7: memref<1x32xf32, #tpu.memory_space<vmem>>, %arg8: memref<32x32xf32, #tpu.memory_space<vmem>>, %arg9: memref<1x32xf32, #tpu.memory_space<vmem>>, %arg10: memref<4x32xf32, #tpu.memory_space<vmem>>) attributes {dimension_semantics = [], scalar_prefetch = 0 : i64, scratch_operands = 0 : i64, tpu.core_type = #tpu.core_type<tc>} {
    %c0 = arith.constant 0 : index
    %c0_0 = arith.constant 0 : index
    %0 = vector.load %arg0[%c0, %c0_0] : memref<4x32xf32, #tpu.memory_space<vmem>>, vector<4x32xf32>
    %c0_1 = arith.constant 0 : index
    %c0_2 = arith.constant 0 : index
    %1 = vector.load %arg1[%c0_1, %c0_2] : memref<16x32xf32, #tpu.memory_space<vmem>>, vector<16x32xf32>
    %c0_3 = arith.constant 0 : index
    %c0_4 = arith.constant 0 : index
    %2 = vector.load %arg2[%c0_3, %c0_4] : memref<32x32xf32, #tpu.memory_space<vmem>>, vector<32x32xf32>
    %c0_5 = arith.constant 0 : index
    %c0_6 = arith.constant 0 : index
    %3 = vector.load %arg3[%c0_5, %c0_6] : memref<32x32xf32, #tpu.memory_space<vmem>>, vector<32x32xf32>
    %c0_7 = arith.constant 0 : index
    %c0_8 = arith.constant 0 : index
    %4 = vector.load %arg4[%c0_7, %c0_8] : memref<32x32xf32, #tpu.memory_space<vmem>>, vector<32x32xf32>
    %c0_9 = arith.constant 0 : index
    %c0_10 = arith.constant 0 : index
    %5 = vector.load %arg5[%c0_9, %c0_10] : memref<32x32xf32, #tpu.memory_space<vmem>>, vector<32x32xf32>
    %c0_11 = arith.constant 0 : index
    %c0_12 = arith.constant 0 : index
    %6 = vector.load %arg6[%c0_11, %c0_12] : memref<32x32xf32, #tpu.memory_space<vmem>>, vector<32x32xf32>
    %c0_13 = arith.constant 0 : index
    %c0_14 = arith.constant 0 : index
    %7 = vector.load %arg7[%c0_13, %c0_14] : memref<1x32xf32, #tpu.memory_space<vmem>>, vector<1x32xf32>
    %c0_15 = arith.constant 0 : index
    %c0_16 = arith.constant 0 : index
    %8 = vector.load %arg8[%c0_15, %c0_16] : memref<32x32xf32, #tpu.memory_space<vmem>>, vector<32x32xf32>
    %c0_17 = arith.constant 0 : index
    %c0_18 = arith.constant 0 : index
    %9 = vector.load %arg9[%c0_17, %c0_18] : memref<1x32xf32, #tpu.memory_space<vmem>>, vector<1x32xf32>
    %cst = arith.constant dense<0.000000e+00> : vector<4x32xf32>
    %10 = tpu.matmul %0, %2, %cst {dimension_numbers = #tpu.dot_dimension_numbers<[1], [0], [0], [1], [0, 0, 1, 1], [], []>} : vector<4x32xf32>, vector<32x32xf32>, vector<4x32xf32> -> vector<4x32xf32>
    %cst_19 = arith.constant dense<0.000000e+00> : vector<16x32xf32>
    %11 = tpu.matmul %1, %3, %cst_19 {dimension_numbers = #tpu.dot_dimension_numbers<[1], [0], [0], [1], [0, 0, 1, 1], [], []>} : vector<16x32xf32>, vector<32x32xf32>, vector<16x32xf32> -> vector<16x32xf32>
    %cst_20 = arith.constant dense<0.000000e+00> : vector<16x32xf32>
    %12 = tpu.matmul %1, %4, %cst_20 {dimension_numbers = #tpu.dot_dimension_numbers<[1], [0], [0], [1], [0, 0, 1, 1], [], []>} : vector<16x32xf32>, vector<32x32xf32>, vector<16x32xf32> -> vector<16x32xf32>
    %cst_21 = arith.constant dense<0.000000e+00> : vector<4x16xf32>
    %13 = tpu.matmul %10, %11, %cst_21 {dimension_numbers = #tpu.dot_dimension_numbers<[1], [1], [0], [0], [0, 0, 1, 0], [], []>} : vector<4x32xf32>, vector<16x32xf32>, vector<4x16xf32> -> vector<4x16xf32>
    %cst_22 = arith.constant 0.176776692 : f32
    %14 = vector.broadcast %cst_22 : f32 to vector<4x16xf32>
    %15 = arith.mulf %13, %14 : vector<4x16xf32>
    %16 = tpu.iota {dimensions = array<i32: 0>} : vector<4x16xi32>
    %17 = tpu.iota {dimensions = array<i32: 1>} : vector<4x16xi32>
    %c4_i32 = arith.constant 4 : i32
    %18 = vector.broadcast %c4_i32 : i32 to vector<4x16xi32>
    %19 = arith.muli %16, %18 : vector<4x16xi32>
    %20 = arith.cmpi sge, %17, %19 : vector<4x16xi32>
    %c1_i32 = arith.constant 1 : i32
    %21 = vector.broadcast %c1_i32 : i32 to vector<4x16xi32>
    %22 = arith.addi %16, %21 : vector<4x16xi32>
    %c4_i32_23 = arith.constant 4 : i32
    %23 = vector.broadcast %c4_i32_23 : i32 to vector<4x16xi32>
    %24 = arith.muli %22, %23 : vector<4x16xi32>
    %25 = arith.cmpi slt, %17, %24 : vector<4x16xi32>
    %26 = arith.andi %20, %25 : vector<4x16xi1>
    %cst_24 = arith.constant 0xFF800000 : f32
    %27 = vector.broadcast %cst_24 : f32 to vector<4x16xf32>
    %28 = arith.select %26, %15, %27 : vector<4x16xi1>, vector<4x16xf32>
    %cst_25 = arith.constant dense<0xFF800000> : vector<4xf32>
    %29 = vector.multi_reduction <maximumf>, %28, %cst_25 [1] : vector<4x16xf32> to vector<4xf32>
    %30 = vector.shape_cast %29 : vector<4xf32> to vector<4x1xf32>
    %31 = vector.broadcast %30 : vector<4x1xf32> to vector<4x16xf32>
    %32 = arith.subf %28, %31 : vector<4x16xf32>
    %33 = math.exp %32 : vector<4x16xf32>
    %cst_26 = arith.constant dense<0.000000e+00> : vector<4xf32>
    %34 = vector.multi_reduction <add>, %33, %cst_26 [1] : vector<4x16xf32> to vector<4xf32>
    %35 = vector.shape_cast %34 : vector<4xf32> to vector<4x1xf32>
    %36 = tpu.reciprocal %35 {approx = true} : vector<4x1xf32> -> vector<4x1xf32>
    %37 = vector.broadcast %36 : vector<4x1xf32> to vector<4x16xf32>
    %38 = arith.mulf %33, %37 : vector<4x16xf32>
    %cst_27 = arith.constant dense<0.000000e+00> : vector<4x32xf32>
    %39 = tpu.matmul %38, %12, %cst_27 {dimension_numbers = #tpu.dot_dimension_numbers<[1], [0], [0], [1], [0, 0, 1, 1], [], []>} : vector<4x16xf32>, vector<16x32xf32>, vector<4x32xf32> -> vector<4x32xf32>
    %cst_28 = arith.constant dense<0.000000e+00> : vector<4x32xf32>
    %40 = tpu.matmul %39, %5, %cst_28 {dimension_numbers = #tpu.dot_dimension_numbers<[1], [0], [0], [1], [0, 0, 1, 1], [], []>} : vector<4x32xf32>, vector<32x32xf32>, vector<4x32xf32> -> vector<4x32xf32>
    %41 = arith.addf %0, %40 : vector<4x32xf32>
    %cst_29 = arith.constant dense<0.000000e+00> : vector<4x32xf32>
    %42 = tpu.matmul %41, %6, %cst_29 {dimension_numbers = #tpu.dot_dimension_numbers<[1], [0], [0], [1], [0, 0, 1, 1], [], []>} : vector<4x32xf32>, vector<32x32xf32>, vector<4x32xf32> -> vector<4x32xf32>
    %43 = vector.broadcast %7 : vector<1x32xf32> to vector<4x32xf32>
    %44 = arith.addf %42, %43 : vector<4x32xf32>
    %cst_30 = arith.constant 0.000000e+00 : f32
    %45 = vector.broadcast %cst_30 : f32 to vector<4x32xf32>
    %46 = arith.maximumf %44, %45 : vector<4x32xf32>
    %cst_31 = arith.constant dense<0.000000e+00> : vector<4x32xf32>
    %47 = tpu.matmul %46, %8, %cst_31 {dimension_numbers = #tpu.dot_dimension_numbers<[1], [0], [0], [1], [0, 0, 1, 1], [], []>} : vector<4x32xf32>, vector<32x32xf32>, vector<4x32xf32> -> vector<4x32xf32>
    %48 = vector.broadcast %9 : vector<1x32xf32> to vector<4x32xf32>
    %49 = arith.addf %47, %48 : vector<4x32xf32>
    %c0_32 = arith.constant 0 : index
    %c0_33 = arith.constant 0 : index
    %50 = vector.load %arg10[%c0_32, %c0_33] : memref<4x32xf32, #tpu.memory_space<vmem>>, vector<4x32xf32>
    tpu.vector_store %arg10[%c0_32, %c0_33], %49 {strides = array<i32>} : memref<4x32xf32, #tpu.memory_space<vmem>>, vector<4x32xf32>,
    return
  }
}

</mosaic_0001>

<llo_original>
// kernel: sim_attention_3_forward.6
$region0: #{sim_attention_3_forward.6}
  #allocation0 [shape = 'u32[]', space=smem, size = 0x4, offset = 0x4, fixed_abs, tag = 'smem constant byte address 0x4 - core index']
  #allocation1 [shape = 'u32[144,128]{1,0:T(1,128)}', space=vmem, size = 0x12000, scoped, tag = 'internal scratch']
  %s0 = inlined_call_operand.vmem [shape: f32[4,32], index: 0, kind: input, shape index: {}]
  %s1 = inlined_call_operand.vmem [shape: f32[16,32], index: 1, kind: input, shape index: {}]
  %s2 = inlined_call_operand.vmem [shape: f32[32,32], index: 2, kind: input, shape index: {}]
  %s3 = inlined_call_operand.vmem [shape: f32[32,32], index: 3, kind: input, shape index: {}]
  %s4 = inlined_call_operand.vmem [shape: f32[32,32], index: 4, kind: input, shape index: {}]
  %s5 = inlined_call_operand.vmem [shape: f32[32,32], index: 5, kind: input, shape index: {}]
  %s6 = inlined_call_operand.vmem [shape: f32[32,32], index: 6, kind: input, shape index: {}]
  %s7 = inlined_call_operand.vmem [shape: f32[1,32], index: 7, kind: input, shape index: {}]
  %s8 = inlined_call_operand.vmem [shape: f32[32,32], index: 8, kind: input, shape index: {}]
  %s9 = inlined_call_operand.vmem [shape: f32[1,32], index: 9, kind: input, shape index: {}]
  %s10 = inlined_call_operand.vmem [shape: f32[32,32], index: 10, kind: input, shape index: {}]
  %s11 = inlined_call_operand.vmem [shape: f32[1,32], index: 11, kind: input, shape index: {}]
  %s12 = inlined_call_operand.vmem [shape: f32[32,32], index: 12, kind: input, shape index: {}]
  %s13 = inlined_call_operand.vmem [shape: f32[1,32], index: 13, kind: input, shape index: {}]
  %s14 = inlined_call_operand.vmem [shape: f32[4,32], index: 14, kind: output, shape index: {}]
  %s15 = sld [smem:[#allocation0]]
  $region66: #{sim_attention_3_forward.6} parent=0
    _
  %s17 = ssub.s32 1, %s15
  %s18 = scalar_select 0, %s17, %s15
  // Predicated region
  $region2: #{sim_attention_3_forward.6} parent=0 // pred_check
    _
  $region3: #{sim_attention_3_forward.6} parent=0 // pred_check_branch
    %20 = sbr.rel (0) target = $region5
  $region4: #{sim_attention_3_forward.6} parent=0 // pred_region
    _
  $region5: #{sim_attention_3_forward.6} parent=0 // pred_fallthru
    _
  // Predicated region
  $region6: #{sim_attention_3_forward.6} parent=0 // pred_check
    _
  $region7: #{sim_attention_3_forward.6} parent=0 // pred_check_branch
    %22 = sbr.rel (0) target = $region9
  $region8: #{sim_attention_3_forward.6} parent=0 // pred_region
    _
  $region9: #{sim_attention_3_forward.6} parent=0 // pred_fallthru
    _
  // Predicated region
  $region10: #{sim_attention_3_forward.6} parent=0 // pred_check
    _
  $region11: #{sim_attention_3_forward.6} parent=0 // pred_check_branch
    %24 = sbr.rel (0) target = $region13
  $region12: #{sim_attention_3_forward.6} parent=0 // pred_region
    _
  $region13: #{sim_attention_3_forward.6} parent=0 // pred_fallthru
    _
  // Predicated region
  $region14: #{sim_attention_3_forward.6} parent=0 // pred_check
    _
  $region15: #{sim_attention_3_forward.6} parent=0 // pred_check_branch
    %26 = sbr.rel (0) target = $region17
  $region16: #{sim_attention_3_forward.6} parent=0 // pred_region
    _
  $region17: #{sim_attention_3_forward.6} parent=0 // pred_fallthru
    _
  // Predicated region
  $region18: #{sim_attention_3_forward.6} parent=0 // pred_check
    _
  $region19: #{sim_attention_3_forward.6} parent=0 // pred_check_branch
    %28 = sbr.rel (0) target = $region21
  $region20: #{sim_attention_3_forward.6} parent=0 // pred_region
    _
  $region21: #{sim_attention_3_forward.6} parent=0 // pred_fallthru
    _
  // Predicated region
  $region22: #{sim_attention_3_forward.6} parent=0 // pred_check
    _
  $region23: #{sim_attention_3_forward.6} parent=0 // pred_check_branch
    %30 = sbr.rel (0) target = $region25
  $region24: #{sim_attention_3_forward.6} parent=0 // pred_region
    _
  $region25: #{sim_attention_3_forward.6} parent=0 // pred_fallthru
    _
  // Predicated region
  $region26: #{sim_attention_3_forward.6} parent=0 // pred_check
    _
  $region27: #{sim_attention_3_forward.6} parent=0 // pred_check_branch
    %32 = sbr.rel (0) target = $region29
  $region28: #{sim_attention_3_forward.6} parent=0 // pred_region
    _
  $region29: #{sim_attention_3_forward.6} parent=0 // pred_fallthru
    _
  // Predicated region
  $region30: #{sim_attention_3_forward.6} parent=0 // pred_check
    _
  $region31: #{sim_attention_3_forward.6} parent=0 // pred_check_branch
    %34 = sbr.rel (0) target = $region33
  $region32: #{sim_attention_3_forward.6} parent=0 // pred_region
    _
  $region33: #{sim_attention_3_forward.6} parent=0 // pred_fallthru
    _
  // Predicated region
  $region34: #{sim_attention_3_forward.6} parent=0 // pred_check
    _
  $region35: #{sim_attention_3_forward.6} parent=0 // pred_check_branch
    %36 = sbr.rel (0) target = $region37
  $region36: #{sim_attention_3_forward.6} parent=0 // pred_region
    _
  $region37: #{sim_attention_3_forward.6} parent=0 // pred_fallthru
    _
  // Predicated region
  $region38: #{sim_attention_3_forward.6} parent=0 // pred_check
    _
  $region39: #{sim_attention_3_forward.6} parent=0 // pred_check_branch
    %38 = sbr.rel (0) target = $region41
  $region40: #{sim_attention_3_forward.6} parent=0 // pred_region
    _
  $region41: #{sim_attention_3_forward.6} parent=0 // pred_fallthru
    _
  // Predicated region
  $region42: #{sim_attention_3_forward.6} parent=0 // pred_check
    _
  $region43: #{sim_attention_3_forward.6} parent=0 // pred_check_branch
    %40 = sbr.rel (0) target = $region45
  $region44: #{sim_attention_3_forward.6} parent=0 // pred_region
    _
  $region45: #{sim_attention_3_forward.6} parent=0 // pred_fallthru
    _
  // Predicated region
  $region46: #{sim_attention_3_forward.6} parent=0 // pred_check
    _
  $region47: #{sim_attention_3_forward.6} parent=0 // pred_check_branch
    %42 = sbr.rel (0) target = $region49
  $region48: #{sim_attention_3_forward.6} parent=0 // pred_region
    _
  $region49: #{sim_attention_3_forward.6} parent=0 // pred_fallthru
    _
  // Predicated region
  $region50: #{sim_attention_3_forward.6} parent=0 // pred_check
    _
  $region51: #{sim_attention_3_forward.6} parent=0 // pred_check_branch
    %44 = sbr.rel (0) target = $region53
  $region52: #{sim_attention_3_forward.6} parent=0 // pred_region
    _
  $region53: #{sim_attention_3_forward.6} parent=0 // pred_fallthru
    _
  // Predicated region
  $region54: #{sim_attention_3_forward.6} parent=0 // pred_check
    _
  $region55: #{sim_attention_3_forward.6} parent=0 // pred_check_branch
    %46 = sbr.rel (0) target = $region57
  $region56: #{sim_attention_3_forward.6} parent=0 // pred_region
    _
  $region57: #{sim_attention_3_forward.6} parent=0 // pred_fallthru
    _
  %v47 = vld [vmem:[%s0] sm:$0xf]
  %v48 = vld [vmem:[%s1] sm:$0xff]
  %v49 = vld [vmem:[%s1 + $0x8] sm:$0xff]
  %v50 = vld [vmem:[%s2] sm:$0xff]
  %v51 = vld [vmem:[%s2 + $0x8] sm:$0xff]
  %v52 = vld [vmem:[%s2 + $0x10] sm:$0xff]
  %v53 = vld [vmem:[%s2 + $0x18] sm:$0xff]
  %v54 = vld [vmem:[%s3] sm:$0xff]
  %v55 = vld [vmem:[%s3 + $0x8] sm:$0xff]
  %v56 = vld [vmem:[%s3 + $0x10] sm:$0xff]
  %v57 = vld [vmem:[%s3 + $0x18] sm:$0xff]
  %v58 = vld [vmem:[%s4] sm:$0xff]
  %v59 = vld [vmem:[%s4 + $0x8] sm:$0xff]
  %v60 = vld [vmem:[%s4 + $0x10] sm:$0xff]
  %v61 = vld [vmem:[%s4 + $0x18] sm:$0xff]
  %v62 = vld [vmem:[%s5] sm:$0xff]
  %v63 = vld [vmem:[%s5 + $0x8] sm:$0xff]
  %v64 = vld [vmem:[%s5 + $0x10] sm:$0xff]
  %v65 = vld [vmem:[%s5 + $0x18] sm:$0xff]
  %v66 = vld [vmem:[%s6] sm:$0xff]
  %v67 = vld [vmem:[%s6 + $0x8] sm:$0xff]
  %v68 = vld [vmem:[%s6 + $0x10] sm:$0xff]
  %v69 = vld [vmem:[%s6 + $0x18] sm:$0xff]
  %v70 = vld [vmem:[%s7] sm:$0x1]
  %v71 = vld [vmem:[%s8] sm:$0xff]
  %v72 = vld [vmem:[%s8 + $0x8] sm:$0xff]
  %v73 = vld [vmem:[%s8 + $0x10] sm:$0xff]
  %v74 = vld [vmem:[%s8 + $0x18] sm:$0xff]
  %v75 = vld [vmem:[%s9] sm:$0x1]
  %vm76 = vcmask 261120
  %v78 = vsel %vm76, %v47, 0
  %80 = vmatprep.subr.mxu0 0.0
  %81 = vmatpush1.msra.mxu0 %v50
  %82 = vmatprep.subr.mxu0 0.0
  %83 = vmatpush1.msra.mxu0 %v51
  %84 = vmatprep.subr.mxu0 0.0
  %85 = vmatpush1.msra.mxu0 %v52
  %86 = vmatprep.subr.mxu0 0.0
  %87 = vmatpush1.msra.mxu0 %v53
  %88 = vmatprep.subr.mxu0 0.0
  %89 = vmatpush1.msra.mxu0 0.0
  %90 = vmatprep.subr.mxu0 0.0
  %91 = vmatpush1.msra.mxu0 0.0
  %92 = vmatprep.subr.mxu0 0.0
  %93 = vmatpush1.msra.mxu0 0.0
  %94 = vmatprep.subr.mxu0 0.0
  %95 = vmatpush1.msra.mxu0 0.0
  %96 = vmatprep.subr.mxu0 0.0
  %97 = vmatpush1.msra.mxu0 0.0
  %98 = vmatprep.subr.mxu0 0.0
  %99 = vmatpush1.msra.mxu0 0.0
  %100 = vmatprep.subr.mxu0 0.0
  %101 = vmatpush1.msra.mxu0 0.0
  %102 = vmatprep.subr.mxu0 0.0
  %103 = vmatpush1.msra.mxu0 0.0
  %104 = vmatprep.subr.mxu0 0.0
  %105 = vmatpush1.msra.mxu0 0.0
  %106 = vmatprep.subr.mxu0 0.0
  %107 = vmatpush1.msra.mxu0 0.0
  %108 = vmatprep.subr.mxu0 0.0
  %109 = vmatpush1.msra.mxu0 0.0
  %110 = vmatprep.subr.mxu0 0.0
  %111 = vmatpush1.msra.mxu0 0.0
  %112 = vmatprep.subr.mxu0 0.0
  %113 = vmatpush1.msra.mxu0 0.0
  %114 = vmatprep.subr.mxu0 0.0
  %115 = vmatpush1.msra.mxu0 0.0
  %116 = vmatprep.subr.mxu0 0.0
  %117 = vmatpush1.msra.mxu0 0.0
  %118 = vmatprep.subr.mxu0 0.0
  %119 = vmatpush1.msra.mxu0 0.0
  %120 = vmatprep.subr.mxu0 0.0
  %121 = vmatpush1.msra.mxu0 0.0
  %122 = vmatprep.subr.mxu0 0.0
  %123 = vmatpush1.msra.mxu0 0.0
  %124 = vmatprep.subr.mxu0 0.0
  %125 = vmatpush1.msra.mxu0 0.0
  %126 = vmatprep.subr.mxu0 0.0
  %127 = vmatpush1.msra.mxu0 0.0
  %128 = vmatprep.subr.mxu0 0.0
  %129 = vmatpush1.msra.mxu0 0.0
  %130 = vmatprep.subr.mxu0 0.0
  %131 = vmatpush1.msra.mxu0 0.0
  %132 = vmatprep.subr.mxu0 0.0
  %133 = vmatpush1.msra.mxu0 0.0
  %134 = vmatprep.subr.mxu0 0.0
  %135 = vmatpush1.msra.mxu0 0.0
  %136 = vmatprep.subr.mxu0 0.0
  %137 = vmatpush1.msra.mxu0 0.0
  %138 = vmatprep.subr.mxu0 0.0
  %139 = vmatpush1.msra.mxu0 0.0
  %140 = vmatprep.subr.mxu0 0.0
  %141 = vmatpush1.msra.mxu0 0.0
  %142 = vmatprep.subr.mxu0 0.0
  %143 = vmatpush1.msra.mxu0 0.0
  %144 = vmatprep.mubr.f32.mxu0 0.0
  %145 = vmatmul.mubr.f32.gmra.mrb[0].mxu0 %v78
  %v146 = vpop.f32.mrb[0].mxu0
  %v147 = vadd.f32 0.0, %v146
  %v148 = vpop.f32.mrb[0].mxu0
  %149 = vdwg.mxu0
  %v151 = vsel %vm76, %v48, 0
  %v154 = vsel %vm76, %v49, 0
  %156 = vmatprep.subr.mxu0 0.0
  %157 = vmatpush1.msra.mxu0 %v54
  %158 = vmatprep.subr.mxu0 0.0
  %159 = vmatpush1.msra.mxu0 %v55
  %160 = vmatprep.subr.mxu0 0.0
  %161 = vmatpush1.msra.mxu0 %v56
  %162 = vmatprep.subr.mxu0 0.0
  %163 = vmatpush1.msra.mxu0 %v57
  %164 = vmatprep.subr.mxu0 0.0
  %165 = vmatpush1.msra.mxu0 0.0
  %166 = vmatprep.subr.mxu0 0.0
  %167 = vmatpush1.msra.mxu0 0.0
  %168 = vmatprep.subr.mxu0 0.0
  %169 = vmatpush1.msra.mxu0 0.0
  %170 = vmatprep.subr.mxu0 0.0
  %171 = vmatpush1.msra.mxu0 0.0
  %172 = vmatprep.subr.mxu0 0.0
  %173 = vmatpush1.msra.mxu0 0.0
  %174 = vmatprep.subr.mxu0 0.0
  %175 = vmatpush1.msra.mxu0 0.0
  %176 = vmatprep.subr.mxu0 0.0
  %177 = vmatpush1.msra.mxu0 0.0
  %178 = vmatprep.subr.mxu0 0.0
  %179 = vmatpush1.msra.mxu0 0.0
  %180 = vmatprep.subr.mxu0 0.0
  %181 = vmatpush1.msra.mxu0 0.0
  %182 = vmatprep.subr.mxu0 0.0
  %183 = vmatpush1.msra.mxu0 0.0
  %184 = vmatprep.subr.mxu0 0.0
  %185 = vmatpush1.msra.mxu0 0.0
  %186 = vmatprep.subr.mxu0 0.0
  %187 = vmatpush1.msra.mxu0 0.0
  %188 = vmatprep.subr.mxu0 0.0
  %189 = vmatpush1.msra.mxu0 0.0
  %190 = vmatprep.subr.mxu0 0.0
  %191 = vmatpush1.msra.mxu0 0.0
  %192 = vmatprep.subr.mxu0 0.0
  %193 = vmatpush1.msra.mxu0 0.0
  %194 = vmatprep.subr.mxu0 0.0
  %195 = vmatpush1.msra.mxu0 0.0
  %196 = vmatprep.subr.mxu0 0.0
  %197 = vmatpush1.msra.mxu0 0.0
  %198 = vmatprep.subr.mxu0 0.0
  %199 = vmatpush1.msra.mxu0 0.0
  %200 = vmatprep.subr.mxu0 0.0
  %201 = vmatpush1.msra.mxu0 0.0
  %202 = vmatprep.subr.mxu0 0.0
  %203 = vmatpush1.msra.mxu0 0.0
  %204 = vmatprep.subr.mxu0 0.0
  %205 = vmatpush1.msra.mxu0 0.0
  %206 = vmatprep.subr.mxu0 0.0
  %207 = vmatpush1.msra.mxu0 0.0
  %208 = vmatprep.subr.mxu0 0.0
  %209 = vmatpush1.msra.mxu0 0.0
  %210 = vmatprep.subr.mxu0 0.0
  %211 = vmatpush1.msra.mxu0 0.0
  %212 = vmatprep.subr.mxu0 0.0
  %213 = vmatpush1.msra.mxu0 0.0
  %214 = vmatprep.subr.mxu0 0.0
  %215 = vmatpush1.msra.mxu0 0.0
  %216 = vmatprep.subr.mxu0 0.0
  %217 = vmatpush1.msra.mxu0 0.0
  %218 = vmatprep.subr.mxu0 0.0
  %219 = vmatpush1.msra.mxu0 0.0
  %220 = vmatprep.mubr.f32.mxu0 0.0
  %221 = vmatmul.mubr.f32.gmra.mrb[0].mxu0 %v151
  %v222 = vpop.f32.mrb[0].mxu0
  %v223 = vadd.f32 0.0, %v222
  %v224 = vpop.f32.mrb[0].mxu0
  %225 = vmatprep.mubr.f32.mxu0 0.0
  %226 = vmatmul.mubr.f32.gmra.mrb[0].mxu0 %v154
  %v227 = vpop.f32.mrb[0].mxu0
  %v228 = vadd.f32 0.0, %v227
  %v229 = vpop.f32.mrb[0].mxu0
  %230 = vdwg.mxu0
  %231 = vmatprep.subr.mxu0 0.0
  %232 = vmatpush1.msra.mxu0 %v58
  %233 = vmatprep.subr.mxu0 0.0
  %234 = vmatpush1.msra.mxu0 %v59
  %235 = vmatprep.subr.mxu0 0.0
  %236 = vmatpush1.msra.mxu0 %v60
  %237 = vmatprep.subr.mxu0 0.0
  %238 = vmatpush1.msra.mxu0 %v61
  %239 = vmatprep.subr.mxu0 0.0
  %240 = vmatpush1.msra.mxu0 0.0
  %241 = vmatprep.subr.mxu0 0.0
  %242 = vmatpush1.msra.mxu0 0.0
  %243 = vmatprep.subr.mxu0 0.0
  %244 = vmatpush1.msra.mxu0 0.0
  %245 = vmatprep.subr.mxu0 0.0
  %246 = vmatpush1.msra.mxu0 0.0
  %247 = vmatprep.subr.mxu0 0.0
  %248 = vmatpush1.msra.mxu0 0.0
  %249 = vmatprep.subr.mxu0 0.0
  %250 = vmatpush1.msra.mxu0 0.0
  %251 = vmatprep.subr.mxu0 0.0
  %252 = vmatpush1.msra.mxu0 0.0
  %253 = vmatprep.subr.mxu0 0.0
  %254 = vmatpush1.msra.mxu0 0.0
  %255 = vmatprep.subr.mxu0 0.0
  %256 = vmatpush1.msra.mxu0 0.0
  %257 = vmatprep.subr.mxu0 0.0
  %258 = vmatpush1.msra.mxu0 0.0
  %259 = vmatprep.subr.mxu0 0.0
  %260 = vmatpush1.msra.mxu0 0.0
  %261 = vmatprep.subr.mxu0 0.0
  %262 = vmatpush1.msra.mxu0 0.0
  %263 = vmatprep.subr.mxu0 0.0
  %264 = vmatpush1.msra.mxu0 0.0
  %265 = vmatprep.subr.mxu0 0.0
  %266 = vmatpush1.msra.mxu0 0.0
  %267 = vmatprep.subr.mxu0 0.0
  %268 = vmatpush1.msra.mxu0 0.0
  %269 = vmatprep.subr.mxu0 0.0
  %270 = vmatpush1.msra.mxu0 0.0
  %271 = vmatprep.subr.mxu0 0.0
  %272 = vmatpush1.msra.mxu0 0.0
  %273 = vmatprep.subr.mxu0 0.0
  %274 = vmatpush1.msra.mxu0 0.0
  %275 = vmatprep.subr.mxu0 0.0
  %276 = vmatpush1.msra.mxu0 0.0
  %277 = vmatprep.subr.mxu0 0.0
  %278 = vmatpush1.msra.mxu0 0.0
  %279 = vmatprep.subr.mxu0 0.0
  %280 = vmatpush1.msra.mxu0 0.0
  %281 = vmatprep.subr.mxu0 0.0
  %282 = vmatpush1.msra.mxu0 0.0
  %283 = vmatprep.subr.mxu0 0.0
  %284 = vmatpush1.msra.mxu0 0.0
  %285 = vmatprep.subr.mxu0 0.0
  %286 = vmatpush1.msra.mxu0 0.0
  %287 = vmatprep.subr.mxu0 0.0
  %288 = vmatpush1.msra.mxu0 0.0
  %289 = vmatprep.subr.mxu0 0.0
  %290 = vmatpush1.msra.mxu0 0.0
  %291 = vmatprep.subr.mxu0 0.0
  %292 = vmatpush1.msra.mxu0 0.0
  %293 = vmatprep.subr.mxu0 0.0
  %294 = vmatpush1.msra.mxu0 0.0
  %295 = vmatprep.mubr.f32.mxu0 0.0
  %296 = vmatmul.mubr.f32.gmra.mrb[0].mxu0 %v151
  %v297 = vpop.f32.mrb[0].mxu0
  %v298 = vadd.f32 0.0, %v297
  %v299 = vpop.f32.mrb[0].mxu0
  %300 = vmatprep.mubr.f32.mxu0 0.0
  %301 = vmatmul.mubr.f32.gmra.mrb[0].mxu0 %v154
  %v302 = vpop.f32.mrb[0].mxu0
  %v303 = vadd.f32 0.0, %v302
  %v304 = vpop.f32.mrb[0].mxu0
  %305 = vdwg.mxu0
  %v307 = vsel %vm76, %v147, 0
  %v310 = vsel %vm76, %v223, 0
  %v313 = vsel %vm76, %v228, 0
  %315 = vmatprep.subr.mxu0 0.0
  %316 = vmatpush1.xpose.msra.mxu0 %v310
  %317 = vmatprep.subr.mxu0 0.0
  %318 = vmatpush1.xpose.msra.mxu0 %v313
  %319 = vmatprep.subr.mxu0 0.0
  %320 = vmatpush1.xpose.msra.mxu0 0.0
  %321 = vmatprep.subr.mxu0 0.0
  %322 = vmatpush1.xpose.msra.mxu0 0.0
  %323 = vmatprep.subr.mxu0 0.0
  %324 = vmatpush1.xpose.msra.mxu0 0.0
  %325 = vmatprep.subr.mxu0 0.0
  %326 = vmatpush1.xpose.msra.mxu0 0.0
  %327 = vmatprep.subr.mxu0 0.0
  %328 = vmatpush1.xpose.msra.mxu0 0.0
  %329 = vmatprep.subr.mxu0 0.0
  %330 = vmatpush1.xpose.msra.mxu0 0.0
  %331 = vmatprep.subr.mxu0 0.0
  %332 = vmatpush1.xpose.msra.mxu0 0.0
  %333 = vmatprep.subr.mxu0 0.0
  %334 = vmatpush1.xpose.msra.mxu0 0.0
  %335 = vmatprep.subr.mxu0 0.0
  %336 = vmatpush1.xpose.msra.mxu0 0.0
  %337 = vmatprep.subr.mxu0 0.0
  %338 = vmatpush1.xpose.msra.mxu0 0.0
  %339 = vmatprep.subr.mxu0 0.0
  %340 = vmatpush1.xpose.msra.mxu0 0.0
  %341 = vmatprep.subr.mxu0 0.0
  %342 = vmatpush1.xpose.msra.mxu0 0.0
  %343 = vmatprep.subr.mxu0 0.0
  %344 = vmatpush1.xpose.msra.mxu0 0.0
  %345 = vmatprep.subr.mxu0 0.0
  %346 = vmatpush1.xpose.msra.mxu0 0.0
  %347 = vmatprep.subr.mxu0 0.0
  %348 = vmatpush1.xpose.msra.mxu0 0.0
  %349 = vmatprep.subr.mxu0 0.0
  %350 = vmatpush1.xpose.msra.mxu0 0.0
  %351 = vmatprep.subr.mxu0 0.0
  %352 = vmatpush1.xpose.msra.mxu0 0.0
  %353 = vmatprep.subr.mxu0 0.0
  %354 = vmatpush1.xpose.msra.mxu0 0.0
  %355 = vmatprep.subr.mxu0 0.0
  %356 = vmatpush1.xpose.msra.mxu0 0.0
  %357 = vmatprep.subr.mxu0 0.0
  %358 = vmatpush1.xpose.msra.mxu0 0.0
  %359 = vmatprep.subr.mxu0 0.0
  %360 = vmatpush1.xpose.msra.mxu0 0.0
  %361 = vmatprep.subr.mxu0 0.0
  %362 = vmatpush1.xpose.msra.mxu0 0.0
  %363 = vmatprep.subr.mxu0 0.0
  %364 = vmatpush1.xpose.msra.mxu0 0.0
  %365 = vmatprep.subr.mxu0 0.0
  %366 = vmatpush1.xpose.msra.mxu0 0.0
  %367 = vmatprep.subr.mxu0 0.0
  %368 = vmatpush1.xpose.msra.mxu0 0.0
  %369 = vmatprep.subr.mxu0 0.0
  %370 = vmatpush1.xpose.msra.mxu0 0.0
  %371 = vmatprep.subr.mxu0 0.0
  %372 = vmatpush1.xpose.msra.mxu0 0.0
  %373 = vmatprep.subr.mxu0 0.0
  %374 = vmatpush1.xpose.msra.mxu0 0.0
  %375 = vmatprep.subr.mxu0 0.0
  %376 = vmatpush1.xpose.msra.mxu0 0.0
  %377 = vmatprep.subr.mxu0 0.0
  %378 = vmatpush1.xpose.msra.mxu0 0.0
  %379 = vmatprep.mubr.f32.mxu0 0.0
  %380 = vmatmul.mubr.f32.gmra.mrb[0].mxu0 %v307
  %v381 = vpop.f32.mrb[0].mxu0
  %v382 = vadd.f32 0.0, %v381
  %v383 = vpop.f32.mrb[0].mxu0
  %384 = vdwg.mxu0
  %v385 = vmul.f32 %v382, 0.17677669
  %v386 = vlaneseq
  %v387 = vshrl.u32 %v386, 7
  %v388 = vlaneseq
  %v389 = vand.u32 %v388, 127
  %v390 = vmul.u32 %v387, 4
  %vm391 = vcmp.ge.s32.totalorder %v389, %v390
  %v392 = vadd.s32 %v387, 1
  %v393 = vmul.u32 %v392, 4
  %vm394 = vcmp.lt.s32.totalorder %v389, %v393
  %vm395 = vmand %vm391, %vm394
  %v396 = vsel %vm395, %v385, -inf
  %vm397 = vcmask 125952
  %v398 = vsel %vm397, %v396, -inf
  %399 = vmax.xlane.f32.xlu0 %v398
  %v400 = vpop.xlane.xlu0 %399
  %v401 = vsub.f32 %v396, %v400
  %v402 = vmul.f32 %v401, 1.442695
  %v403 = vpow.pop %v402
  %v404 = vsel %vm397, %v403, 0.0
  %405 = vadd.xlane.f32.xlu0 %v404
  %v406 = vpop.xlane.xlu0 %405
  %v407 = vrcp.pop %v406
  %v408 = vmul.f32 %v403, %v407
  %vm409 = vcmask 130048
  %v411 = vsel %vm409, %v408, 0
  %413 = vmatprep.subr.mxu0 0.0
  %414 = vmatpush1.msra.mxu0 %v298
  %415 = vmatprep.subr.mxu0 0.0
  %416 = vmatpush1.msra.mxu0 %v303
  %417 = vmatprep.subr.mxu0 0.0
  %418 = vmatpush1.msra.mxu0 0.0
  %419 = vmatprep.subr.mxu0 0.0
  %420 = vmatpush1.msra.mxu0 0.0
  %421 = vmatprep.subr.mxu0 0.0
  %422 = vmatpush1.msra.mxu0 0.0
  %423 = vmatprep.subr.mxu0 0.0
  %424 = vmatpush1.msra.mxu0 0.0
  %425 = vmatprep.subr.mxu0 0.0
  %426 = vmatpush1.msra.mxu0 0.0
  %427 = vmatprep.subr.mxu0 0.0
  %428 = vmatpush1.msra.mxu0 0.0
  %429 = vmatprep.subr.mxu0 0.0
  %430 = vmatpush1.msra.mxu0 0.0
  %431 = vmatprep.subr.mxu0 0.0
  %432 = vmatpush1.msra.mxu0 0.0
  %433 = vmatprep.subr.mxu0 0.0
  %434 = vmatpush1.msra.mxu0 0.0
  %435 = vmatprep.subr.mxu0 0.0
  %436 = vmatpush1.msra.mxu0 0.0
  %437 = vmatprep.subr.mxu0 0.0
  %438 = vmatpush1.msra.mxu0 0.0
  %439 = vmatprep.subr.mxu0 0.0
  %440 = vmatpush1.msra.mxu0 0.0
  %441 = vmatprep.subr.mxu0 0.0
  %442 = vmatpush1.msra.mxu0 0.0
  %443 = vmatprep.subr.mxu0 0.0
  %444 = vmatpush1.msra.mxu0 0.0
  %445 = vmatprep.subr.mxu0 0.0
  %446 = vmatpush1.msra.mxu0 0.0
  %447 = vmatprep.subr.mxu0 0.0
  %448 = vmatpush1.msra.mxu0 0.0
  %449 = vmatprep.subr.mxu0 0.0
  %450 = vmatpush1.msra.mxu0 0.0
  %451 = vmatprep.subr.mxu0 0.0
  %452 = vmatpush1.msra.mxu0 0.0
  %453 = vmatprep.subr.mxu0 0.0
  %454 = vmatpush1.msra.mxu0 0.0
  %455 = vmatprep.subr.mxu0 0.0
  %456 = vmatpush1.msra.mxu0 0.0
  %457 = vmatprep.subr.mxu0 0.0
  %458 = vmatpush1.msra.mxu0 0.0
  %459 = vmatprep.subr.mxu0 0.0
  %460 = vmatpush1.msra.mxu0 0.0
  %461 = vmatprep.subr.mxu0 0.0
  %462 = vmatpush1.msra.mxu0 0.0
  %463 = vmatprep.subr.mxu0 0.0
  %464 = vmatpush1.msra.mxu0 0.0
  %465 = vmatprep.subr.mxu0 0.0
  %466 = vmatpush1.msra.mxu0 0.0
  %467 = vmatprep.subr.mxu0 0.0
  %468 = vmatpush1.msra.mxu0 0.0
  %469 = vmatprep.subr.mxu0 0.0
  %470 = vmatpush1.msra.mxu0 0.0
  %471 = vmatprep.subr.mxu0 0.0
  %472 = vmatpush1.msra.mxu0 0.0
  %473 = vmatprep.subr.mxu0 0.0
  %474 = vmatpush1.msra.mxu0 0.0
  %475 = vmatprep.subr.mxu0 0.0
  %476 = vmatpush1.msra.mxu0 0.0
  %477 = vmatprep.mubr.f32.mxu0 0.0
  %478 = vmatmul.mubr.f32.gmra.mrb[0].mxu0 %v411
  %v479 = vpop.f32.mrb[0].mxu0
  %v480 = vadd.f32 0.0, %v479
  %v481 = vpop.f32.mrb[0].mxu0
  %482 = vdwg.mxu0
  %v484 = vsel %vm76, %v480, 0
  %486 = vmatprep.subr.mxu0 0.0
  %487 = vmatpush1.msra.mxu0 %v62
  %488 = vmatprep.subr.mxu0 0.0
  %489 = vmatpush1.msra.mxu0 %v63
  %490 = vmatprep.subr.mxu0 0.0
  %491 = vmatpush1.msra.mxu0 %v64
  %492 = vmatprep.subr.mxu0 0.0
  %493 = vmatpush1.msra.mxu0 %v65
  %494 = vmatprep.subr.mxu0 0.0
  %495 = vmatpush1.msra.mxu0 0.0
  %496 = vmatprep.subr.mxu0 0.0
  %497 = vmatpush1.msra.mxu0 0.0
  %498 = vmatprep.subr.mxu0 0.0
  %499 = vmatpush1.msra.mxu0 0.0
  %500 = vmatprep.subr.mxu0 0.0
  %501 = vmatpush1.msra.mxu0 0.0
  %502 = vmatprep.subr.mxu0 0.0
  %503 = vmatpush1.msra.mxu0 0.0
  %504 = vmatprep.subr.mxu0 0.0
  %505 = vmatpush1.msra.mxu0 0.0
  %506 = vmatprep.subr.mxu0 0.0
  %507 = vmatpush1.msra.mxu0 0.0
  %508 = vmatprep.subr.mxu0 0.0
  %509 = vmatpush1.msra.mxu0 0.0
  %510 = vmatprep.subr.mxu0 0.0
  %511 = vmatpush1.msra.mxu0 0.0
  %512 = vmatprep.subr.mxu0 0.0
  %513 = vmatpush1.msra.mxu0 0.0
  %514 = vmatprep.subr.mxu0 0.0
  %515 = vmatpush1.msra.mxu0 0.0
  %516 = vmatprep.subr.mxu0 0.0
  %517 = vmatpush1.msra.mxu0 0.0
  %518 = vmatprep.subr.mxu0 0.0
  %519 = vmatpush1.msra.mxu0 0.0
  %520 = vmatprep.subr.mxu0 0.0
  %521 = vmatpush1.msra.mxu0 0.0
  %522 = vmatprep.subr.mxu0 0.0
  %523 = vmatpush1.msra.mxu0 0.0
  %524 = vmatprep.subr.mxu0 0.0
  %525 = vmatpush1.msra.mxu0 0.0
  %526 = vmatprep.subr.mxu0 0.0
  %527 = vmatpush1.msra.mxu0 0.0
  %528 = vmatprep.subr.mxu0 0.0
  %529 = vmatpush1.msra.mxu0 0.0
  %530 = vmatprep.subr.mxu0 0.0
  %531 = vmatpush1.msra.mxu0 0.0
  %532 = vmatprep.subr.mxu0 0.0
  %533 = vmatpush1.msra.mxu0 0.0
  %534 = vmatprep.subr.mxu0 0.0
  %535 = vmatpush1.msra.mxu0 0.0
  %536 = vmatprep.subr.mxu0 0.0
  %537 = vmatpush1.msra.mxu0 0.0
  %538 = vmatprep.subr.mxu0 0.0
  %539 = vmatpush1.msra.mxu0 0.0
  %540 = vmatprep.subr.mxu0 0.0
  %541 = vmatpush1.msra.mxu0 0.0
  %542 = vmatprep.subr.mxu0 0.0
  %543 = vmatpush1.msra.mxu0 0.0
  %544 = vmatprep.subr.mxu0 0.0
  %545 = vmatpush1.msra.mxu0 0.0
  %546 = vmatprep.subr.mxu0 0.0
  %547 = vmatpush1.msra.mxu0 0.0
  %548 = vmatprep.subr.mxu0 0.0
  %549 = vmatpush1.msra.mxu0 0.0
  %550 = vmatprep.mubr.f32.mxu0 0.0
  %551 = vmatmul.mubr.f32.gmra.mrb[0].mxu0 %v484
  %v552 = vpop.f32.mrb[0].mxu0
  %v553 = vadd.f32 0.0, %v552
  %v554 = vpop.f32.mrb[0].mxu0
  %555 = vdwg.mxu0
  %v556 = vadd.f32 %v47, %v553
  %v558 = vlaneseq
  %v559 = vshrl.u32 %v558, 7
  %v560 = vsub.s32 0, %v559
  %v561 = vrot.slane %v70, %v560
  %v564 = vsel %vm76, %v556, 0
  %566 = vmatprep.subr.mxu0 0.0
  %567 = vmatpush1.msra.mxu0 %v66
  %568 = vmatprep.subr.mxu0 0.0
  %569 = vmatpush1.msra.mxu0 %v67
  %570 = vmatprep.subr.mxu0 0.0
  %571 = vmatpush1.msra.mxu0 %v68
  %572 = vmatprep.subr.mxu0 0.0
  %573 = vmatpush1.msra.mxu0 %v69
  %574 = vmatprep.subr.mxu0 0.0
  %575 = vmatpush1.msra.mxu0 0.0
  %576 = vmatprep.subr.mxu0 0.0
  %577 = vmatpush1.msra.mxu0 0.0
  %578 = vmatprep.subr.mxu0 0.0
  %579 = vmatpush1.msra.mxu0 0.0
  %580 = vmatprep.subr.mxu0 0.0
  %581 = vmatpush1.msra.mxu0 0.0
  %582 = vmatprep.subr.mxu0 0.0
  %583 = vmatpush1.msra.mxu0 0.0
  %584 = vmatprep.subr.mxu0 0.0
  %585 = vmatpush1.msra.mxu0 0.0
  %586 = vmatprep.subr.mxu0 0.0
  %587 = vmatpush1.msra.mxu0 0.0
  %588 = vmatprep.subr.mxu0 0.0
  %589 = vmatpush1.msra.mxu0 0.0
  %590 = vmatprep.subr.mxu0 0.0
  %591 = vmatpush1.msra.mxu0 0.0
  %592 = vmatprep.subr.mxu0 0.0
  %593 = vmatpush1.msra.mxu0 0.0
  %594 = vmatprep.subr.mxu0 0.0
  %595 = vmatpush1.msra.mxu0 0.0
  %596 = vmatprep.subr.mxu0 0.0
  %597 = vmatpush1.msra.mxu0 0.0
  %598 = vmatprep.subr.mxu0 0.0
  %599 = vmatpush1.msra.mxu0 0.0
  %600 = vmatprep.subr.mxu0 0.0
  %601 = vmatpush1.msra.mxu0 0.0
  %602 = vmatprep.subr.mxu0 0.0
  %603 = vmatpush1.msra.mxu0 0.0
  %604 = vmatprep.subr.mxu0 0.0
  %605 = vmatpush1.msra.mxu0 0.0
  %606 = vmatprep.subr.mxu0 0.0
  %607 = vmatpush1.msra.mxu0 0.0
  %608 = vmatprep.subr.mxu0 0.0
  %609 = vmatpush1.msra.mxu0 0.0
  %610 = vmatprep.subr.mxu0 0.0
  %611 = vmatpush1.msra.mxu0 0.0
  %612 = vmatprep.subr.mxu0 0.0
  %613 = vmatpush1.msra.mxu0 0.0
  %614 = vmatprep.subr.mxu0 0.0
  %615 = vmatpush1.msra.mxu0 0.0
  %616 = vmatprep.subr.mxu0 0.0
  %617 = vmatpush1.msra.mxu0 0.0
  %618 = vmatprep.subr.mxu0 0.0
  %619 = vmatpush1.msra.mxu0 0.0
  %620 = vmatprep.subr.mxu0 0.0
  %621 = vmatpush1.msra.mxu0 0.0
  %622 = vmatprep.subr.mxu0 0.0
  %623 = vmatpush1.msra.mxu0 0.0
  %624 = vmatprep.subr.mxu0 0.0
  %625 = vmatpush1.msra.mxu0 0.0
  %626 = vmatprep.subr.mxu0 0.0
  %627 = vmatpush1.msra.mxu0 0.0
  %628 = vmatprep.subr.mxu0 0.0
  %629 = vmatpush1.msra.mxu0 0.0
  %630 = vmatprep.mubr.f32.mxu0 0.0
  %631 = vmatmul.mubr.f32.gmra.mrb[0].mxu0 %v564
  %v632 = vpop.f32.mrb[0].mxu0
  %v633 = vadd.f32 %v561, %v632
  %v634 = vpop.f32.mrb[0].mxu0
  %635 = vdwg.mxu0
  %v636 = vmax.f32 %v633, 0.0
  %v638 = vlaneseq
  %v639 = vshrl.u32 %v638, 7
  %v640 = vsub.s32 0, %v639
  %v641 = vrot.slane %v75, %v640
  %v644 = vsel %vm76, %v636, 0
  %646 = vmatprep.subr.mxu0 0.0
  %647 = vmatpush1.msra.mxu0 %v71
  %648 = vmatprep.subr.mxu0 0.0
  %649 = vmatpush1.msra.mxu0 %v72
  %650 = vmatprep.subr.mxu0 0.0
  %651 = vmatpush1.msra.mxu0 %v73
  %652 = vmatprep.subr.mxu0 0.0
  %653 = vmatpush1.msra.mxu0 %v74
  %654 = vmatprep.subr.mxu0 0.0
  %655 = vmatpush1.msra.mxu0 0.0
  %656 = vmatprep.subr.mxu0 0.0
  %657 = vmatpush1.msra.mxu0 0.0
  %658 = vmatprep.subr.mxu0 0.0
  %659 = vmatpush1.msra.mxu0 0.0
  %660 = vmatprep.subr.mxu0 0.0
  %661 = vmatpush1.msra.mxu0 0.0
  %662 = vmatprep.subr.mxu0 0.0
  %663 = vmatpush1.msra.mxu0 0.0
  %664 = vmatprep.subr.mxu0 0.0
  %665 = vmatpush1.msra.mxu0 0.0
  %666 = vmatprep.subr.mxu0 0.0
  %667 = vmatpush1.msra.mxu0 0.0
  %668 = vmatprep.subr.mxu0 0.0
  %669 = vmatpush1.msra.mxu0 0.0
  %670 = vmatprep.subr.mxu0 0.0
  %671 = vmatpush1.msra.mxu0 0.0
  %672 = vmatprep.subr.mxu0 0.0
  %673 = vmatpush1.msra.mxu0 0.0
  %674 = vmatprep.subr.mxu0 0.0
  %675 = vmatpush1.msra.mxu0 0.0
  %676 = vmatprep.subr.mxu0 0.0
  %677 = vmatpush1.msra.mxu0 0.0
  %678 = vmatprep.subr.mxu0 0.0
  %679 = vmatpush1.msra.mxu0 0.0
  %680 = vmatprep.subr.mxu0 0.0
  %681 = vmatpush1.msra.mxu0 0.0
  %682 = vmatprep.subr.mxu0 0.0
  %683 = vmatpush1.msra.mxu0 0.0
  %684 = vmatprep.subr.mxu0 0.0
  %685 = vmatpush1.msra.mxu0 0.0
  %686 = vmatprep.subr.mxu0 0.0
  %687 = vmatpush1.msra.mxu0 0.0
  %688 = vmatprep.subr.mxu0 0.0
  %689 = vmatpush1.msra.mxu0 0.0
  %690 = vmatprep.subr.mxu0 0.0
  %691 = vmatpush1.msra.mxu0 0.0
  %692 = vmatprep.subr.mxu0 0.0
  %693 = vmatpush1.msra.mxu0 0.0
  %694 = vmatprep.subr.mxu0 0.0
  %695 = vmatpush1.msra.mxu0 0.0
  %696 = vmatprep.subr.mxu0 0.0
  %697 = vmatpush1.msra.mxu0 0.0
  %698 = vmatprep.subr.mxu0 0.0
  %699 = vmatpush1.msra.mxu0 0.0
  %700 = vmatprep.subr.mxu0 0.0
  %701 = vmatpush1.msra.mxu0 0.0
  %702 = vmatprep.subr.mxu0 0.0
  %703 = vmatpush1.msra.mxu0 0.0
  %704 = vmatprep.subr.mxu0 0.0
  %705 = vmatpush1.msra.mxu0 0.0
  %706 = vmatprep.subr.mxu0 0.0
  %707 = vmatpush1.msra.mxu0 0.0
  %708 = vmatprep.subr.mxu0 0.0
  %709 = vmatpush1.msra.mxu0 0.0
  %710 = vmatprep.mubr.f32.mxu0 0.0
  %711 = vmatmul.mubr.f32.gmra.mrb[0].mxu0 %v644
  %v712 = vpop.f32.mrb[0].mxu0
  %v713 = vadd.f32 %v641, %v712
  %v714 = vpop.f32.mrb[0].mxu0
  %715 = vdwg.mxu0
  %v716 = vld [vmem:[%s10] sm:$0xff]
  %v717 = vld [vmem:[%s10 + $0x8] sm:$0xff]
  %v718 = vld [vmem:[%s10 + $0x10] sm:$0xff]
  %v719 = vld [vmem:[%s10 + $0x18] sm:$0xff]
  %v720 = vld [vmem:[%s11] sm:$0x1]
  %v722 = vlaneseq
  %v723 = vshrl.u32 %v722, 7
  %v724 = vsub.s32 0, %v723
  %v725 = vrot.slane %v720, %v724
  %v728 = vsel %vm76, %v713, 0
  %730 = vmatprep.subr.mxu0 0.0
  %731 = vmatpush1.msra.mxu0 %v716
  %732 = vmatprep.subr.mxu0 0.0
  %733 = vmatpush1.msra.mxu0 %v717
  %734 = vmatprep.subr.mxu0 0.0
  %735 = vmatpush1.msra.mxu0 %v718
  %736 = vmatprep.subr.mxu0 0.0
  %737 = vmatpush1.msra.mxu0 %v719
  %738 = vmatprep.subr.mxu0 0.0
  %739 = vmatpush1.msra.mxu0 0.0
  %740 = vmatprep.subr.mxu0 0.0
  %741 = vmatpush1.msra.mxu0 0.0
  %742 = vmatprep.subr.mxu0 0.0
  %743 = vmatpush1.msra.mxu0 0.0
  %744 = vmatprep.subr.mxu0 0.0
  %745 = vmatpush1.msra.mxu0 0.0
  %746 = vmatprep.subr.mxu0 0.0
  %747 = vmatpush1.msra.mxu0 0.0
  %748 = vmatprep.subr.mxu0 0.0
  %749 = vmatpush1.msra.mxu0 0.0
  %750 = vmatprep.subr.mxu0 0.0
  %751 = vmatpush1.msra.mxu0 0.0
  %752 = vmatprep.subr.mxu0 0.0
  %753 = vmatpush1.msra.mxu0 0.0
  %754 = vmatprep.subr.mxu0 0.0
  %755 = vmatpush1.msra.mxu0 0.0
  %756 = vmatprep.subr.mxu0 0.0
  %757 = vmatpush1.msra.mxu0 0.0
  %758 = vmatprep.subr.mxu0 0.0
  %759 = vmatpush1.msra.mxu0 0.0
  %760 = vmatprep.subr.mxu0 0.0
  %761 = vmatpush1.msra.mxu0 0.0
  %762 = vmatprep.subr.mxu0 0.0
  %763 = vmatpush1.msra.mxu0 0.0
  %764 = vmatprep.subr.mxu0 0.0
  %765 = vmatpush1.msra.mxu0 0.0
  %766 = vmatprep.subr.mxu0 0.0
  %767 = vmatpush1.msra.mxu0 0.0
  %768 = vmatprep.subr.mxu0 0.0
  %769 = vmatpush1.msra.mxu0 0.0
  %770 = vmatprep.subr.mxu0 0.0
  %771 = vmatpush1.msra.mxu0 0.0
  %772 = vmatprep.subr.mxu0 0.0
  %773 = vmatpush1.msra.mxu0 0.0
  %774 = vmatprep.subr.mxu0 0.0
  %775 = vmatpush1.msra.mxu0 0.0
  %776 = vmatprep.subr.mxu0 0.0
  %777 = vmatpush1.msra.mxu0 0.0
  %778 = vmatprep.subr.mxu0 0.0
  %779 = vmatpush1.msra.mxu0 0.0
  %780 = vmatprep.subr.mxu0 0.0
  %781 = vmatpush1.msra.mxu0 0.0
  %782 = vmatprep.subr.mxu0 0.0
  %783 = vmatpush1.msra.mxu0 0.0
  %784 = vmatprep.subr.mxu0 0.0
  %785 = vmatpush1.msra.mxu0 0.0
  %786 = vmatprep.subr.mxu0 0.0
  %787 = vmatpush1.msra.mxu0 0.0
  %788 = vmatprep.subr.mxu0 0.0
  %789 = vmatpush1.msra.mxu0 0.0
  %790 = vmatprep.subr.mxu0 0.0
  %791 = vmatpush1.msra.mxu0 0.0
  %792 = vmatprep.subr.mxu0 0.0
  %793 = vmatpush1.msra.mxu0 0.0
  %794 = vmatprep.mubr.f32.mxu0 0.0
  %795 = vmatmul.mubr.f32.gmra.mrb[0].mxu0 %v728
  %v796 = vpop.f32.mrb[0].mxu0
  %v797 = vadd.f32 %v725, %v796
  %v798 = vpop.f32.mrb[0].mxu0
  %799 = vdwg.mxu0
  %v800 = vmax.f32 %v797, 0.0
  %v801 = vld [vmem:[%s12] sm:$0xff]
  %v802 = vld [vmem:[%s12 + $0x8] sm:$0xff]
  %v803 = vld [vmem:[%s12 + $0x10] sm:$0xff]
  %v804 = vld [vmem:[%s12 + $0x18] sm:$0xff]
  %v805 = vld [vmem:[%s13] sm:$0x1]
  %v807 = vlaneseq
  %v808 = vshrl.u32 %v807, 7
  %v809 = vsub.s32 0, %v808
  %v810 = vrot.slane %v805, %v809
  %v813 = vsel %vm76, %v800, 0
  %815 = vmatprep.subr.mxu0 0.0
  %816 = vmatpush1.msra.mxu0 %v801
  %817 = vmatprep.subr.mxu0 0.0
  %818 = vmatpush1.msra.mxu0 %v802
  %819 = vmatprep.subr.mxu0 0.0
  %820 = vmatpush1.msra.mxu0 %v803
  %821 = vmatprep.subr.mxu0 0.0
  %822 = vmatpush1.msra.mxu0 %v804
  %823 = vmatprep.subr.mxu0 0.0
  %824 = vmatpush1.msra.mxu0 0.0
  %825 = vmatprep.subr.mxu0 0.0
  %826 = vmatpush1.msra.mxu0 0.0
  %827 = vmatprep.subr.mxu0 0.0
  %828 = vmatpush1.msra.mxu0 0.0
  %829 = vmatprep.subr.mxu0 0.0
  %830 = vmatpush1.msra.mxu0 0.0
  %831 = vmatprep.subr.mxu0 0.0
  %832 = vmatpush1.msra.mxu0 0.0
  %833 = vmatprep.subr.mxu0 0.0
  %834 = vmatpush1.msra.mxu0 0.0
  %835 = vmatprep.subr.mxu0 0.0
  %836 = vmatpush1.msra.mxu0 0.0
  %837 = vmatprep.subr.mxu0 0.0
  %838 = vmatpush1.msra.mxu0 0.0
  %839 = vmatprep.subr.mxu0 0.0
  %840 = vmatpush1.msra.mxu0 0.0
  %841 = vmatprep.subr.mxu0 0.0
  %842 = vmatpush1.msra.mxu0 0.0
  %843 = vmatprep.subr.mxu0 0.0
  %844 = vmatpush1.msra.mxu0 0.0
  %845 = vmatprep.subr.mxu0 0.0
  %846 = vmatpush1.msra.mxu0 0.0
  %847 = vmatprep.subr.mxu0 0.0
  %848 = vmatpush1.msra.mxu0 0.0
  %849 = vmatprep.subr.mxu0 0.0
  %850 = vmatpush1.msra.mxu0 0.0
  %851 = vmatprep.subr.mxu0 0.0
  %852 = vmatpush1.msra.mxu0 0.0
  %853 = vmatprep.subr.mxu0 0.0
  %854 = vmatpush1.msra.mxu0 0.0
  %855 = vmatprep.subr.mxu0 0.0
  %856 = vmatpush1.msra.mxu0 0.0
  %857 = vmatprep.subr.mxu0 0.0
  %858 = vmatpush1.msra.mxu0 0.0
  %859 = vmatprep.subr.mxu0 0.0
  %860 = vmatpush1.msra.mxu0 0.0
  %861 = vmatprep.subr.mxu0 0.0
  %862 = vmatpush1.msra.mxu0 0.0
  %863 = vmatprep.subr.mxu0 0.0
  %864 = vmatpush1.msra.mxu0 0.0
  %865 = vmatprep.subr.mxu0 0.0
  %866 = vmatpush1.msra.mxu0 0.0
  %867 = vmatprep.subr.mxu0 0.0
  %868 = vmatpush1.msra.mxu0 0.0
  %869 = vmatprep.subr.mxu0 0.0
  %870 = vmatpush1.msra.mxu0 0.0
  %871 = vmatprep.subr.mxu0 0.0
  %872 = vmatpush1.msra.mxu0 0.0
  %873 = vmatprep.subr.mxu0 0.0
  %874 = vmatpush1.msra.mxu0 0.0
  %875 = vmatprep.subr.mxu0 0.0
  %876 = vmatpush1.msra.mxu0 0.0
  %877 = vmatprep.subr.mxu0 0.0
  %878 = vmatpush1.msra.mxu0 0.0
  %879 = vmatprep.mubr.f32.mxu0 0.0
  %880 = vmatmul.mubr.f32.gmra.mrb[0].mxu0 %v813
  %v881 = vpop.f32.mrb[0].mxu0
  %v882 = vadd.f32 %v810, %v881
  %v883 = vpop.f32.mrb[0].mxu0
  %884 = vdwg.mxu0
  %vm885 = vcmask 257024
  %886 = vst.msk [vmem:[%s14] sm:$0xf] %vm885, %v882
  // Predicated region
  $region58: #{sim_attention_3_forward.6} parent=0 // pred_check
    _
  $region59: #{sim_attention_3_forward.6} parent=0 // pred_check_branch
    %888 = sbr.rel (0) target = $region61
  $region60: #{sim_attention_3_forward.6} parent=0 // pred_region
    _
  $region61: #{sim_attention_3_forward.6} parent=0 // pred_fallthru
    _
  // Predicated region
  $region62: #{sim_attention_3_forward.6} parent=0 // pred_check
    _
  $region63: #{sim_attention_3_forward.6} parent=0 // pred_check_branch
    %890 = sbr.rel (0) target = $region65
  $region64: #{sim_attention_3_forward.6} parent=0 // pred_region
    _
  $region65: #{sim_attention_3_forward.6} parent=0 // pred_fallthru
    _

// kernel: sim_attention_3_forward.4
$region0: #{sim_attention_3_forward.4}
  #allocation0 [shape = 'u32[]', space=smem, size = 0x4, offset = 0x4, fixed_abs, tag = 'smem constant byte address 0x4 - core index']
  #allocation1 [shape = 'u32[144,128]{1,0:T(1,128)}', space=vmem, size = 0x12000, scoped, tag = 'internal scratch']
  %s0 = inlined_call_operand.vmem [shape: f32[256,3], index: 0, kind: input, shape index: {}]
  %s1 = inlined_call_operand.vmem [shape: f32[3,32], index: 1, kind: input, shape index: {}]
  %s2 = inlined_call_operand.vmem [shape: f32[1,32], index: 2, kind: input, shape index: {}]
  %s3 = inlined_call_operand.vmem [shape: f32[32,32], index: 3, kind: input, shape index: {}]
  %s4 = inlined_call_operand.vmem [shape: f32[1,32], index: 4, kind: input, shape index: {}]
  %s5 = inlined_call_operand.vmem [shape: f32[4,32], index: 5, kind: output, shape index: {0}]
  %s6 = inlined_call_operand.vmem [shape: f32[16,32], index: 6, kind: output, shape index: {1}]
  %7 = xla_tuple %s5, %s6
  %s8 = sld [smem:[#allocation0]]
  $region38: #{sim_attention_3_forward.4} parent=0
    _
  %s10 = ssub.s32 1, %s8
  %s11 = scalar_select 0, %s10, %s8
  // Predicated region
  $region2: #{sim_attention_3_forward.4} parent=0 // pred_check
    _
  $region3: #{sim_attention_3_forward.4} parent=0 // pred_check_branch
    %13 = sbr.rel (0) target = $region5
  $region4: #{sim_attention_3_forward.4} parent=0 // pred_region
    _
  $region5: #{sim_attention_3_forward.4} parent=0 // pred_fallthru
    _
  // Predicated region
  $region6: #{sim_attention_3_forward.4} parent=0 // pred_check
    _
  $region7: #{sim_attention_3_forward.4} parent=0 // pred_check_branch
    %15 = sbr.rel (0) target = $region9
  $region8: #{sim_attention_3_forward.4} parent=0 // pred_region
    _
  $region9: #{sim_attention_3_forward.4} parent=0 // pred_fallthru
    _
  // Predicated region
  $region10: #{sim_attention_3_forward.4} parent=0 // pred_check
    _
  $region11: #{sim_attention_3_forward.4} parent=0 // pred_check_branch
    %17 = sbr.rel (0) target = $region13
  $region12: #{sim_attention_3_forward.4} parent=0 // pred_region
    _
  $region13: #{sim_attention_3_forward.4} parent=0 // pred_fallthru
    _
  // Predicated region
  $region14: #{sim_attention_3_forward.4} parent=0 // pred_check
    _
  $region15: #{sim_attention_3_forward.4} parent=0 // pred_check_branch
    %19 = sbr.rel (0) target = $region17
  $region16: #{sim_attention_3_forward.4} parent=0 // pred_region
    _
  $region17: #{sim_attention_3_forward.4} parent=0 // pred_fallthru
    _
  // Predicated region
  $region18: #{sim_attention_3_forward.4} parent=0 // pred_check
    _
  $region19: #{sim_attention_3_forward.4} parent=0 // pred_check_branch
    %21 = sbr.rel (0) target = $region21
  $region20: #{sim_attention_3_forward.4} parent=0 // pred_region
    _
  $region21: #{sim_attention_3_forward.4} parent=0 // pred_fallthru
    _
  %v22 = vld [vmem:[%s0] sm:$0xff]
  %v23 = vld [vmem:[%s0 + $0x8] sm:$0xff]
  %v24 = vld [vmem:[%s0 + $0x10] sm:$0xff]
  %v25 = vld [vmem:[%s0 + $0x18] sm:$0xff]
  %v26 = vld [vmem:[%s0 + $0x20] sm:$0xff]
  %v27 = vld [vmem:[%s0 + $0x28] sm:$0xff]
  %v28 = vld [vmem:[%s0 + $0x30] sm:$0xff]
  %v29 = vld [vmem:[%s0 + $0x38] sm:$0xff]
  %v30 = vld [vmem:[%s0 + $0x40] sm:$0xff]
  %v31 = vld [vmem:[%s0 + $0x48] sm:$0xff]
  %v32 = vld [vmem:[%s0 + $0x50] sm:$0xff]
  %v33 = vld [vmem:[%s0 + $0x58] sm:$0xff]
  %v34 = vld [vmem:[%s0 + $0x60] sm:$0xff]
  %v35 = vld [vmem:[%s0 + $0x68] sm:$0xff]
  %v36 = vld [vmem:[%s0 + $0x70] sm:$0xff]
  %v37 = vld [vmem:[%s0 + $0x78] sm:$0xff]
  %v38 = vld [vmem:[%s0 + $0x80] sm:$0xff]
  %v39 = vld [vmem:[%s0 + $0x88] sm:$0xff]
  %v40 = vld [vmem:[%s0 + $0x90] sm:$0xff]
  %v41 = vld [vmem:[%s0 + $0x98] sm:$0xff]
  %v42 = vld [vmem:[%s0 + $0xa0] sm:$0xff]
  %v43 = vld [vmem:[%s0 + $0xa8] sm:$0xff]
  %v44 = vld [vmem:[%s0 + $0xb0] sm:$0xff]
  %v45 = vld [vmem:[%s0 + $0xb8] sm:$0xff]
  %v46 = vld [vmem:[%s0 + $0xc0] sm:$0xff]
  %v47 = vld [vmem:[%s0 + $0xc8] sm:$0xff]
  %v48 = vld [vmem:[%s0 + $0xd0] sm:$0xff]
  %v49 = vld [vmem:[%s0 + $0xd8] sm:$0xff]
  %v50 = vld [vmem:[%s0 + $0xe0] sm:$0xff]
  %v51 = vld [vmem:[%s0 + $0xe8] sm:$0xff]
  %v52 = vld [vmem:[%s0 + $0xf0] sm:$0xff]
  %v53 = vld [vmem:[%s0 + $0xf8] sm:$0xff]
  %v54 = vld [vmem:[%s1] sm:$0x7]
  %v55 = vld [vmem:[%s2] sm:$0x1]
  %v57 = vlaneseq
  %v58 = vshrl.u32 %v57, 7
  %v59 = vsub.s32 0, %v58
  %v60 = vrot.slane %v55, %v59
  %vm62 = vcmask 23552
  %v64 = vsel %vm62, %v22, 0
  %v67 = vsel %vm62, %v23, 0
  %v70 = vsel %vm62, %v24, 0
  %v73 = vsel %vm62, %v25, 0
  %v76 = vsel %vm62, %v26, 0
  %v79 = vsel %vm62, %v27, 0
  %v82 = vsel %vm62, %v28, 0
  %v85 = vsel %vm62, %v29, 0
  %v88 = vsel %vm62, %v30, 0
  %v91 = vsel %vm62, %v31, 0
  %v94 = vsel %vm62, %v32, 0
  %v97 = vsel %vm62, %v33, 0
  %v100 = vsel %vm62, %v34, 0
  %v103 = vsel %vm62, %v35, 0
  %v106 = vsel %vm62, %v36, 0
  %v109 = vsel %vm62, %v37, 0
  %v112 = vsel %vm62, %v38, 0
  %v115 = vsel %vm62, %v39, 0
  %v118 = vsel %vm62, %v40, 0
  %v121 = vsel %vm62, %v41, 0
  %v124 = vsel %vm62, %v42, 0
  %v127 = vsel %vm62, %v43, 0
  %v130 = vsel %vm62, %v44, 0
  %v133 = vsel %vm62, %v45, 0
  %v136 = vsel %vm62, %v46, 0
  %v139 = vsel %vm62, %v47, 0
  %v142 = vsel %vm62, %v48, 0
  %v145 = vsel %vm62, %v49, 0
  %v148 = vsel %vm62, %v50, 0
  %v151 = vsel %vm62, %v51, 0
  %v154 = vsel %vm62, %v52, 0
  %v157 = vsel %vm62, %v53, 0
  %vm159 = vcmask 1042432
  %v161 = vsel %vm159, %v54, 0
  %163 = vmatprep.subr.mxu0 0.0
  %164 = vmatpush1.msra.mxu0 %v161
  %165 = vmatprep.subr.mxu0 0.0
  %166 = vmatpush1.msra.mxu0 0.0
  %167 = vmatprep.subr.mxu0 0.0
  %168 = vmatpush1.msra.mxu0 0.0
  %169 = vmatprep.subr.mxu0 0.0
  %170 = vmatpush1.msra.mxu0 0.0
  %171 = vmatprep.subr.mxu0 0.0
  %172 = vmatpush1.msra.mxu0 0.0
  %173 = vmatprep.subr.mxu0 0.0
  %174 = vmatpush1.msra.mxu0 0.0
  %175 = vmatprep.subr.mxu0 0.0
  %176 = vmatpush1.msra.mxu0 0.0
  %177 = vmatprep.subr.mxu0 0.0
  %178 = vmatpush1.msra.mxu0 0.0
  %179 = vmatprep.subr.mxu0 0.0
  %180 = vmatpush1.msra.mxu0 0.0
  %181 = vmatprep.subr.mxu0 0.0
  %182 = vmatpush1.msra.mxu0 0.0
  %183 = vmatprep.subr.mxu0 0.0
  %184 = vmatpush1.msra.mxu0 0.0
  %185 = vmatprep.subr.mxu0 0.0
  %186 = vmatpush1.msra.mxu0 0.0
  %187 = vmatprep.subr.mxu0 0.0
  %188 = vmatpush1.msra.mxu0 0.0
  %189 = vmatprep.subr.mxu0 0.0
  %190 = vmatpush1.msra.mxu0 0.0
  %191 = vmatprep.subr.mxu0 0.0
  %192 = vmatpush1.msra.mxu0 0.0
  %193 = vmatprep.subr.mxu0 0.0
  %194 = vmatpush1.msra.mxu0 0.0
  %195 = vmatprep.subr.mxu0 0.0
  %196 = vmatpush1.msra.mxu0 0.0
  %197 = vmatprep.subr.mxu0 0.0
  %198 = vmatpush1.msra.mxu0 0.0
  %199 = vmatprep.subr.mxu0 0.0
  %200 = vmatpush1.msra.mxu0 0.0
  %201 = vmatprep.subr.mxu0 0.0
  %202 = vmatpush1.msra.mxu0 0.0
  %203 = vmatprep.subr.mxu0 0.0
  %204 = vmatpush1.msra.mxu0 0.0
  %205 = vmatprep.subr.mxu0 0.0
  %206 = vmatpush1.msra.mxu0 0.0
  %207 = vmatprep.subr.mxu0 0.0
  %208 = vmatpush1.msra.mxu0 0.0
  %209 = vmatprep.subr.mxu0 0.0
  %210 = vmatpush1.msra.mxu0 0.0
  %211 = vmatprep.subr.mxu0 0.0
  %212 = vmatpush1.msra.mxu0 0.0
  %213 = vmatprep.subr.mxu0 0.0
  %214 = vmatpush1.msra.mxu0 0.0
  %215 = vmatprep.subr.mxu0 0.0
  %216 = vmatpush1.msra.mxu0 0.0
  %217 = vmatprep.subr.mxu0 0.0
  %218 = vmatpush1.msra.mxu0 0.0
  %219 = vmatprep.subr.mxu0 0.0
  %220 = vmatpush1.msra.mxu0 0.0
  %221 = vmatprep.subr.mxu0 0.0
  %222 = vmatpush1.msra.mxu0 0.0
  %223 = vmatprep.subr.mxu0 0.0
  %224 = vmatpush1.msra.mxu0 0.0
  %225 = vmatprep.subr.mxu0 0.0
  %226 = vmatpush1.msra.mxu0 0.0
  %227 = vmatprep.mubr.f32.mxu0 0.0
  %228 = vmatmul.mubr.f32.gmra.mrb[0].mxu0 %v64
  %v229 = vpop.f32.mrb[0].mxu0
  %v230 = vadd.f32 %v60, %v229
  %v231 = vpop.f32.mrb[0].mxu0
  %232 = vmatprep.mubr.f32.mxu0 0.0
  %233 = vmatmul.mubr.f32.gmra.mrb[0].mxu0 %v67
  %v234 = vpop.f32.mrb[0].mxu0
  %v235 = vadd.f32 %v60, %v234
  %v236 = vpop.f32.mrb[0].mxu0
  %237 = vmatprep.mubr.f32.mxu0 0.0
  %238 = vmatmul.mubr.f32.gmra.mrb[0].mxu0 %v70
  %v239 = vpop.f32.mrb[0].mxu0
  %v240 = vadd.f32 %v60, %v239
  %v241 = vpop.f32.mrb[0].mxu0
  %242 = vmatprep.mubr.f32.mxu0 0.0
  %243 = vmatmul.mubr.f32.gmra.mrb[0].mxu0 %v73
  %v244 = vpop.f32.mrb[0].mxu0
  %v245 = vadd.f32 %v60, %v244
  %v246 = vpop.f32.mrb[0].mxu0
  %247 = vmatprep.mubr.f32.mxu0 0.0
  %248 = vmatmul.mubr.f32.gmra.mrb[0].mxu0 %v76
  %v249 = vpop.f32.mrb[0].mxu0
  %v250 = vadd.f32 %v60, %v249
  %v251 = vpop.f32.mrb[0].mxu0
  %252 = vmatprep.mubr.f32.mxu0 0.0
  %253 = vmatmul.mubr.f32.gmra.mrb[0].mxu0 %v79
  %v254 = vpop.f32.mrb[0].mxu0
  %v255 = vadd.f32 %v60, %v254
  %v256 = vpop.f32.mrb[0].mxu0
  %257 = vmatprep.mubr.f32.mxu0 0.0
  %258 = vmatmul.mubr.f32.gmra.mrb[0].mxu0 %v82
  %v259 = vpop.f32.mrb[0].mxu0
  %v260 = vadd.f32 %v60, %v259
  %v261 = vpop.f32.mrb[0].mxu0
  %262 = vmatprep.mubr.f32.mxu0 0.0
  %263 = vmatmul.mubr.f32.gmra.mrb[0].mxu0 %v85
  %v264 = vpop.f32.mrb[0].mxu0
  %v265 = vadd.f32 %v60, %v264
  %v266 = vpop.f32.mrb[0].mxu0
  %267 = vmatprep.mubr.f32.mxu0 0.0
  %268 = vmatmul.mubr.f32.gmra.mrb[0].mxu0 %v88
  %v269 = vpop.f32.mrb[0].mxu0
  %v270 = vadd.f32 %v60, %v269
  %v271 = vpop.f32.mrb[0].mxu0
  %272 = vmatprep.mubr.f32.mxu0 0.0
  %273 = vmatmul.mubr.f32.gmra.mrb[0].mxu0 %v91
  %v274 = vpop.f32.mrb[0].mxu0
  %v275 = vadd.f32 %v60, %v274
  %v276 = vpop.f32.mrb[0].mxu0
  %277 = vmatprep.mubr.f32.mxu0 0.0
  %278 = vmatmul.mubr.f32.gmra.mrb[0].mxu0 %v94
  %v279 = vpop.f32.mrb[0].mxu0
  %v280 = vadd.f32 %v60, %v279
  %v281 = vpop.f32.mrb[0].mxu0
  %282 = vmatprep.mubr.f32.mxu0 0.0
  %283 = vmatmul.mubr.f32.gmra.mrb[0].mxu0 %v97
  %v284 = vpop.f32.mrb[0].mxu0
  %v285 = vadd.f32 %v60, %v284
  %v286 = vpop.f32.mrb[0].mxu0
  %287 = vmatprep.mubr.f32.mxu0 0.0
  %288 = vmatmul.mubr.f32.gmra.mrb[0].mxu0 %v100
  %v289 = vpop.f32.mrb[0].mxu0
  %v290 = vadd.f32 %v60, %v289
  %v291 = vpop.f32.mrb[0].mxu0
  %292 = vmatprep.mubr.f32.mxu0 0.0
  %293 = vmatmul.mubr.f32.gmra.mrb[0].mxu0 %v103
  %v294 = vpop.f32.mrb[0].mxu0
  %v295 = vadd.f32 %v60, %v294
  %v296 = vpop.f32.mrb[0].mxu0
  %297 = vmatprep.mubr.f32.mxu0 0.0
  %298 = vmatmul.mubr.f32.gmra.mrb[0].mxu0 %v106
  %v299 = vpop.f32.mrb[0].mxu0
  %v300 = vadd.f32 %v60, %v299
  %v301 = vpop.f32.mrb[0].mxu0
  %302 = vmatprep.mubr.f32.mxu0 0.0
  %303 = vmatmul.mubr.f32.gmra.mrb[0].mxu0 %v109
  %v304 = vpop.f32.mrb[0].mxu0
  %v305 = vadd.f32 %v60, %v304
  %v306 = vpop.f32.mrb[0].mxu0
  %307 = vmatprep.mubr.f32.mxu0 0.0
  %308 = vmatmul.mubr.f32.gmra.mrb[0].mxu0 %v112
  %v309 = vpop.f32.mrb[0].mxu0
  %v310 = vadd.f32 %v60, %v309
  %v311 = vpop.f32.mrb[0].mxu0
  %312 = vmatprep.mubr.f32.mxu0 0.0
  %313 = vmatmul.mubr.f32.gmra.mrb[0].mxu0 %v115
  %v314 = vpop.f32.mrb[0].mxu0
  %v315 = vadd.f32 %v60, %v314
  %v316 = vpop.f32.mrb[0].mxu0
  %317 = vmatprep.mubr.f32.mxu0 0.0
  %318 = vmatmul.mubr.f32.gmra.mrb[0].mxu0 %v118
  %v319 = vpop.f32.mrb[0].mxu0
  %v320 = vadd.f32 %v60, %v319
  %v321 = vpop.f32.mrb[0].mxu0
  %322 = vmatprep.mubr.f32.mxu0 0.0
  %323 = vmatmul.mubr.f32.gmra.mrb[0].mxu0 %v121
  %v324 = vpop.f32.mrb[0].mxu0
  %v325 = vadd.f32 %v60, %v324
  %v326 = vpop.f32.mrb[0].mxu0
  %327 = vmatprep.mubr.f32.mxu0 0.0
  %328 = vmatmul.mubr.f32.gmra.mrb[0].mxu0 %v124
  %v329 = vpop.f32.mrb[0].mxu0
  %v330 = vadd.f32 %v60, %v329
  %v331 = vpop.f32.mrb[0].mxu0
  %332 = vmatprep.mubr.f32.mxu0 0.0
  %333 = vmatmul.mubr.f32.gmra.mrb[0].mxu0 %v127
  %v334 = vpop.f32.mrb[0].mxu0
  %v335 = vadd.f32 %v60, %v334
  %v336 = vpop.f32.mrb[0].mxu0
  %337 = vmatprep.mubr.f32.mxu0 0.0
  %338 = vmatmul.mubr.f32.gmra.mrb[0].mxu0 %v130
  %v339 = vpop.f32.mrb[0].mxu0
  %v340 = vadd.f32 %v60, %v339
  %v341 = vpop.f32.mrb[0].mxu0
  %342 = vmatprep.mubr.f32.mxu0 0.0
  %343 = vmatmul.mubr.f32.gmra.mrb[0].mxu0 %v133
  %v344 = vpop.f32.mrb[0].mxu0
  %v345 = vadd.f32 %v60, %v344
  %v346 = vpop.f32.mrb[0].mxu0
  %347 = vmatprep.mubr.f32.mxu0 0.0
  %348 = vmatmul.mubr.f32.gmra.mrb[0].mxu0 %v136
  %v349 = vpop.f32.mrb[0].mxu0
  %v350 = vadd.f32 %v60, %v349
  %v351 = vpop.f32.mrb[0].mxu0
  %352 = vmatprep.mubr.f32.mxu0 0.0
  %353 = vmatmul.mubr.f32.gmra.mrb[0].mxu0 %v139
  %v354 = vpop.f32.mrb[0].mxu0
  %v355 = vadd.f32 %v60, %v354
  %v356 = vpop.f32.mrb[0].mxu0
  %357 = vmatprep.mubr.f32.mxu0 0.0
  %358 = vmatmul.mubr.f32.gmra.mrb[0].mxu0 %v142
  %v359 = vpop.f32.mrb[0].mxu0
  %v360 = vadd.f32 %v60, %v359
  %v361 = vpop.f32.mrb[0].mxu0
  %362 = vmatprep.mubr.f32.mxu0 0.0
  %363 = vmatmul.mubr.f32.gmra.mrb[0].mxu0 %v145
  %v364 = vpop.f32.mrb[0].mxu0
  %v365 = vadd.f32 %v60, %v364
  %v366 = vpop.f32.mrb[0].mxu0
  %367 = vmatprep.mubr.f32.mxu0 0.0
  %368 = vmatmul.mubr.f32.gmra.mrb[0].mxu0 %v148
  %v369 = vpop.f32.mrb[0].mxu0
  %v370 = vadd.f32 %v60, %v369
  %v371 = vpop.f32.mrb[0].mxu0
  %372 = vmatprep.mubr.f32.mxu0 0.0
  %373 = vmatmul.mubr.f32.gmra.mrb[0].mxu0 %v151
  %v374 = vpop.f32.mrb[0].mxu0
  %v375 = vadd.f32 %v60, %v374
  %v376 = vpop.f32.mrb[0].mxu0
  %377 = vmatprep.mubr.f32.mxu0 0.0
  %378 = vmatmul.mubr.f32.gmra.mrb[0].mxu0 %v154
  %v379 = vpop.f32.mrb[0].mxu0
  %v380 = vadd.f32 %v60, %v379
  %v381 = vpop.f32.mrb[0].mxu0
  %382 = vmatprep.mubr.f32.mxu0 0.0
  %383 = vmatmul.mubr.f32.gmra.mrb[0].mxu0 %v157
  %v384 = vpop.f32.mrb[0].mxu0
  %v385 = vadd.f32 %v60, %v384
  %v386 = vpop.f32.mrb[0].mxu0
  %387 = vdwg.mxu0
  %v388 = vmax.f32 %v230, 0.0
  %v389 = vmax.f32 %v235, 0.0
  %v390 = vmax.f32 %v240, 0.0
  %v391 = vmax.f32 %v245, 0.0
  %v392 = vmax.f32 %v250, 0.0
  %v393 = vmax.f32 %v255, 0.0
  %v394 = vmax.f32 %v260, 0.0
  %v395 = vmax.f32 %v265, 0.0
  %v396 = vmax.f32 %v270, 0.0
  %v397 = vmax.f32 %v275, 0.0
  %v398 = vmax.f32 %v280, 0.0
  %v399 = vmax.f32 %v285, 0.0
  %v400 = vmax.f32 %v290, 0.0
  %v401 = vmax.f32 %v295, 0.0
  %v402 = vmax.f32 %v300, 0.0
  %v403 = vmax.f32 %v305, 0.0
  %v404 = vmax.f32 %v310, 0.0
  %v405 = vmax.f32 %v315, 0.0
  %v406 = vmax.f32 %v320, 0.0
  %v407 = vmax.f32 %v325, 0.0
  %v408 = vmax.f32 %v330, 0.0
  %v409 = vmax.f32 %v335, 0.0
  %v410 = vmax.f32 %v340, 0.0
  %v411 = vmax.f32 %v345, 0.0
  %v412 = vmax.f32 %v350, 0.0
  %v413 = vmax.f32 %v355, 0.0
  %v414 = vmax.f32 %v360, 0.0
  %v415 = vmax.f32 %v365, 0.0
  %v416 = vmax.f32 %v370, 0.0
  %v417 = vmax.f32 %v375, 0.0
  %v418 = vmax.f32 %v380, 0.0
  %v419 = vmax.f32 %v385, 0.0
  %v420 = vld [vmem:[%s3] sm:$0xff]
  %v421 = vld [vmem:[%s3 + $0x8] sm:$0xff]
  %v422 = vld [vmem:[%s3 + $0x10] sm:$0xff]
  %v423 = vld [vmem:[%s3 + $0x18] sm:$0xff]
  %v424 = vld [vmem:[%s4] sm:$0x1]
  %v426 = vlaneseq
  %v427 = vshrl.u32 %v426, 7
  %v428 = vsub.s32 0, %v427
  %v429 = vrot.slane %v424, %v428
  %vm431 = vcmask 261120
  %v433 = vsel %vm431, %v388, 0
  %v436 = vsel %vm431, %v389, 0
  %v439 = vsel %vm431, %v390, 0
  %v442 = vsel %vm431, %v391, 0
  %v445 = vsel %vm431, %v392, 0
  %v448 = vsel %vm431, %v393, 0
  %v451 = vsel %vm431, %v394, 0
  %v454 = vsel %vm431, %v395, 0
  %v457 = vsel %vm431, %v396, 0
  %v460 = vsel %vm431, %v397, 0
  %v463 = vsel %vm431, %v398, 0
  %v466 = vsel %vm431, %v399, 0
  %v469 = vsel %vm431, %v400, 0
  %v472 = vsel %vm431, %v401, 0
  %v475 = vsel %vm431, %v402, 0
  %v478 = vsel %vm431, %v403, 0
  %v481 = vsel %vm431, %v404, 0
  %v484 = vsel %vm431, %v405, 0
  %v487 = vsel %vm431, %v406, 0
  %v490 = vsel %vm431, %v407, 0
  %v493 = vsel %vm431, %v408, 0
  %v496 = vsel %vm431, %v409, 0
  %v499 = vsel %vm431, %v410, 0
  %v502 = vsel %vm431, %v411, 0
  %v505 = vsel %vm431, %v412, 0
  %v508 = vsel %vm431, %v413, 0
  %v511 = vsel %vm431, %v414, 0
  %v514 = vsel %vm431, %v415, 0
  %v517 = vsel %vm431, %v416, 0
  %v520 = vsel %vm431, %v417, 0
  %v523 = vsel %vm431, %v418, 0
  %v526 = vsel %vm431, %v419, 0
  %528 = vmatprep.subr.mxu0 0.0
  %529 = vmatpush1.msra.mxu0 %v420
  %530 = vmatprep.subr.mxu0 0.0
  %531 = vmatpush1.msra.mxu0 %v421
  %532 = vmatprep.subr.mxu0 0.0
  %533 = vmatpush1.msra.mxu0 %v422
  %534 = vmatprep.subr.mxu0 0.0
  %535 = vmatpush1.msra.mxu0 %v423
  %536 = vmatprep.subr.mxu0 0.0
  %537 = vmatpush1.msra.mxu0 0.0
  %538 = vmatprep.subr.mxu0 0.0
  %539 = vmatpush1.msra.mxu0 0.0
  %540 = vmatprep.subr.mxu0 0.0
  %541 = vmatpush1.msra.mxu0 0.0
  %542 = vmatprep.subr.mxu0 0.0
  %543 = vmatpush1.msra.mxu0 0.0
  %544 = vmatprep.subr.mxu0 0.0
  %545 = vmatpush1.msra.mxu0 0.0
  %546 = vmatprep.subr.mxu0 0.0
  %547 = vmatpush1.msra.mxu0 0.0
  %548 = vmatprep.subr.mxu0 0.0
  %549 = vmatpush1.msra.mxu0 0.0
  %550 = vmatprep.subr.mxu0 0.0
  %551 = vmatpush1.msra.mxu0 0.0
  %552 = vmatprep.subr.mxu0 0.0
  %553 = vmatpush1.msra.mxu0 0.0
  %554 = vmatprep.subr.mxu0 0.0
  %555 = vmatpush1.msra.mxu0 0.0
  %556 = vmatprep.subr.mxu0 0.0
  %557 = vmatpush1.msra.mxu0 0.0
  %558 = vmatprep.subr.mxu0 0.0
  %559 = vmatpush1.msra.mxu0 0.0
  %560 = vmatprep.subr.mxu0 0.0
  %561 = vmatpush1.msra.mxu0 0.0
  %562 = vmatprep.subr.mxu0 0.0
  %563 = vmatpush1.msra.mxu0 0.0
  %564 = vmatprep.subr.mxu0 0.0
  %565 = vmatpush1.msra.mxu0 0.0
  %566 = vmatprep.subr.mxu0 0.0
  %567 = vmatpush1.msra.mxu0 0.0
  %568 = vmatprep.subr.mxu0 0.0
  %569 = vmatpush1.msra.mxu0 0.0
  %570 = vmatprep.subr.mxu0 0.0
  %571 = vmatpush1.msra.mxu0 0.0
  %572 = vmatprep.subr.mxu0 0.0
  %573 = vmatpush1.msra.mxu0 0.0
  %574 = vmatprep.subr.mxu0 0.0
  %575 = vmatpush1.msra.mxu0 0.0
  %576 = vmatprep.subr.mxu0 0.0
  %577 = vmatpush1.msra.mxu0 0.0
  %578 = vmatprep.subr.mxu0 0.0
  %579 = vmatpush1.msra.mxu0 0.0
  %580 = vmatprep.subr.mxu0 0.0
  %581 = vmatpush1.msra.mxu0 0.0
  %582 = vmatprep.subr.mxu0 0.0
  %583 = vmatpush1.msra.mxu0 0.0
  %584 = vmatprep.subr.mxu0 0.0
  %585 = vmatpush1.msra.mxu0 0.0
  %586 = vmatprep.subr.mxu0 0.0
  %587 = vmatpush1.msra.mxu0 0.0
  %588 = vmatprep.subr.mxu0 0.0
  %589 = vmatpush1.msra.mxu0 0.0
  %590 = vmatprep.subr.mxu0 0.0
  %591 = vmatpush1.msra.mxu0 0.0
  %592 = vmatprep.mubr.f32.mxu0 0.0
  %593 = vmatmul.mubr.f32.gmra.mrb[0].mxu0 %v433
  %v594 = vpop.f32.mrb[0].mxu0
  %v595 = vadd.f32 %v429, %v594
  %v596 = vpop.f32.mrb[0].mxu0
  %597 = vmatprep.mubr.f32.mxu0 0.0
  %598 = vmatmul.mubr.f32.gmra.mrb[0].mxu0 %v436
  %v599 = vpop.f32.mrb[0].mxu0
  %v600 = vadd.f32 %v429, %v599
  %v601 = vpop.f32.mrb[0].mxu0
  %602 = vmatprep.mubr.f32.mxu0 0.0
  %603 = vmatmul.mubr.f32.gmra.mrb[0].mxu0 %v439
  %v604 = vpop.f32.mrb[0].mxu0
  %v605 = vadd.f32 %v429, %v604
  %v606 = vpop.f32.mrb[0].mxu0
  %607 = vmatprep.mubr.f32.mxu0 0.0
  %608 = vmatmul.mubr.f32.gmra.mrb[0].mxu0 %v442
  %v609 = vpop.f32.mrb[0].mxu0
  %v610 = vadd.f32 %v429, %v609
  %v611 = vpop.f32.mrb[0].mxu0
  %612 = vmatprep.mubr.f32.mxu0 0.0
  %613 = vmatmul.mubr.f32.gmra.mrb[0].mxu0 %v445
  %v614 = vpop.f32.mrb[0].mxu0
  %v615 = vadd.f32 %v429, %v614
  %v616 = vpop.f32.mrb[0].mxu0
  %617 = vmatprep.mubr.f32.mxu0 0.0
  %618 = vmatmul.mubr.f32.gmra.mrb[0].mxu0 %v448
  %v619 = vpop.f32.mrb[0].mxu0
  %v620 = vadd.f32 %v429, %v619
  %v621 = vpop.f32.mrb[0].mxu0
  %622 = vmatprep.mubr.f32.mxu0 0.0
  %623 = vmatmul.mubr.f32.gmra.mrb[0].mxu0 %v451
  %v624 = vpop.f32.mrb[0].mxu0
  %v625 = vadd.f32 %v429, %v624
  %v626 = vpop.f32.mrb[0].mxu0
  %627 = vmatprep.mubr.f32.mxu0 0.0
  %628 = vmatmul.mubr.f32.gmra.mrb[0].mxu0 %v454
  %v629 = vpop.f32.mrb[0].mxu0
  %v630 = vadd.f32 %v429, %v629
  %v631 = vpop.f32.mrb[0].mxu0
  %632 = vmatprep.mubr.f32.mxu0 0.0
  %633 = vmatmul.mubr.f32.gmra.mrb[0].mxu0 %v457
  %v634 = vpop.f32.mrb[0].mxu0
  %v635 = vadd.f32 %v429, %v634
  %v636 = vpop.f32.mrb[0].mxu0
  %637 = vmatprep.mubr.f32.mxu0 0.0
  %638 = vmatmul.mubr.f32.gmra.mrb[0].mxu0 %v460
  %v639 = vpop.f32.mrb[0].mxu0
  %v640 = vadd.f32 %v429, %v639
  %v641 = vpop.f32.mrb[0].mxu0
  %642 = vmatprep.mubr.f32.mxu0 0.0
  %643 = vmatmul.mubr.f32.gmra.mrb[0].mxu0 %v463
  %v644 = vpop.f32.mrb[0].mxu0
  %v645 = vadd.f32 %v429, %v644
  %v646 = vpop.f32.mrb[0].mxu0
  %647 = vmatprep.mubr.f32.mxu0 0.0
  %648 = vmatmul.mubr.f32.gmra.mrb[0].mxu0 %v466
  %v649 = vpop.f32.mrb[0].mxu0
  %v650 = vadd.f32 %v429, %v649
  %v651 = vpop.f32.mrb[0].mxu0
  %652 = vmatprep.mubr.f32.mxu0 0.0
  %653 = vmatmul.mubr.f32.gmra.mrb[0].mxu0 %v469
  %v654 = vpop.f32.mrb[0].mxu0
  %v655 = vadd.f32 %v429, %v654
  %v656 = vpop.f32.mrb[0].mxu0
  %657 = vmatprep.mubr.f32.mxu0 0.0
  %658 = vmatmul.mubr.f32.gmra.mrb[0].mxu0 %v472
  %v659 = vpop.f32.mrb[0].mxu0
  %v660 = vadd.f32 %v429, %v659
  %v661 = vpop.f32.mrb[0].mxu0
  %662 = vmatprep.mubr.f32.mxu0 0.0
  %663 = vmatmul.mubr.f32.gmra.mrb[0].mxu0 %v475
  %v664 = vpop.f32.mrb[0].mxu0
  %v665 = vadd.f32 %v429, %v664
  %v666 = vpop.f32.mrb[0].mxu0
  %667 = vmatprep.mubr.f32.mxu0 0.0
  %668 = vmatmul.mubr.f32.gmra.mrb[0].mxu0 %v478
  %v669 = vpop.f32.mrb[0].mxu0
  %v670 = vadd.f32 %v429, %v669
  %v671 = vpop.f32.mrb[0].mxu0
  %672 = vmatprep.mubr.f32.mxu0 0.0
  %673 = vmatmul.mubr.f32.gmra.mrb[0].mxu0 %v481
  %v674 = vpop.f32.mrb[0].mxu0
  %v675 = vadd.f32 %v429, %v674
  %v676 = vpop.f32.mrb[0].mxu0
  %677 = vmatprep.mubr.f32.mxu0 0.0
  %678 = vmatmul.mubr.f32.gmra.mrb[0].mxu0 %v484
  %v679 = vpop.f32.mrb[0].mxu0
  %v680 = vadd.f32 %v429, %v679
  %v681 = vpop.f32.mrb[0].mxu0
  %682 = vmatprep.mubr.f32.mxu0 0.0
  %683 = vmatmul.mubr.f32.gmra.mrb[0].mxu0 %v487
  %v684 = vpop.f32.mrb[0].mxu0
  %v685 = vadd.f32 %v429, %v684
  %v686 = vpop.f32.mrb[0].mxu0
  %687 = vmatprep.mubr.f32.mxu0 0.0
  %688 = vmatmul.mubr.f32.gmra.mrb[0].mxu0 %v490
  %v689 = vpop.f32.mrb[0].mxu0
  %v690 = vadd.f32 %v429, %v689
  %v691 = vpop.f32.mrb[0].mxu0
  %692 = vmatprep.mubr.f32.mxu0 0.0
  %693 = vmatmul.mubr.f32.gmra.mrb[0].mxu0 %v493
  %v694 = vpop.f32.mrb[0].mxu0
  %v695 = vadd.f32 %v429, %v694
  %v696 = vpop.f32.mrb[0].mxu0
  %697 = vmatprep.mubr.f32.mxu0 0.0
  %698 = vmatmul.mubr.f32.gmra.mrb[0].mxu0 %v496
  %v699 = vpop.f32.mrb[0].mxu0
  %v700 = vadd.f32 %v429, %v699
  %v701 = vpop.f32.mrb[0].mxu0
  %702 = vmatprep.mubr.f32.mxu0 0.0
  %703 = vmatmul.mubr.f32.gmra.mrb[0].mxu0 %v499
  %v704 = vpop.f32.mrb[0].mxu0
  %v705 = vadd.f32 %v429, %v704
  %v706 = vpop.f32.mrb[0].mxu0
  %707 = vmatprep.mubr.f32.mxu0 0.0
  %708 = vmatmul.mubr.f32.gmra.mrb[0].mxu0 %v502
  %v709 = vpop.f32.mrb[0].mxu0
  %v710 = vadd.f32 %v429, %v709
  %v711 = vpop.f32.mrb[0].mxu0
  %712 = vmatprep.mubr.f32.mxu0 0.0
  %713 = vmatmul.mubr.f32.gmra.mrb[0].mxu0 %v505
  %v714 = vpop.f32.mrb[0].mxu0
  %v715 = vadd.f32 %v429, %v714
  %v716 = vpop.f32.mrb[0].mxu0
  %717 = vmatprep.mubr.f32.mxu0 0.0
  %718 = vmatmul.mubr.f32.gmra.mrb[0].mxu0 %v508
  %v719 = vpop.f32.mrb[0].mxu0
  %v720 = vadd.f32 %v429, %v719
  %v721 = vpop.f32.mrb[0].mxu0
  %722 = vmatprep.mubr.f32.mxu0 0.0
  %723 = vmatmul.mubr.f32.gmra.mrb[0].mxu0 %v511
  %v724 = vpop.f32.mrb[0].mxu0
  %v725 = vadd.f32 %v429, %v724
  %v726 = vpop.f32.mrb[0].mxu0
  %727 = vmatprep.mubr.f32.mxu0 0.0
  %728 = vmatmul.mubr.f32.gmra.mrb[0].mxu0 %v514
  %v729 = vpop.f32.mrb[0].mxu0
  %v730 = vadd.f32 %v429, %v729
  %v731 = vpop.f32.mrb[0].mxu0
  %732 = vmatprep.mubr.f32.mxu0 0.0
  %733 = vmatmul.mubr.f32.gmra.mrb[0].mxu0 %v517
  %v734 = vpop.f32.mrb[0].mxu0
  %v735 = vadd.f32 %v429, %v734
  %v736 = vpop.f32.mrb[0].mxu0
  %737 = vmatprep.mubr.f32.mxu0 0.0
  %738 = vmatmul.mubr.f32.gmra.mrb[0].mxu0 %v520
  %v739 = vpop.f32.mrb[0].mxu0
  %v740 = vadd.f32 %v429, %v739
  %v741 = vpop.f32.mrb[0].mxu0
  %742 = vmatprep.mubr.f32.mxu0 0.0
  %743 = vmatmul.mubr.f32.gmra.mrb[0].mxu0 %v523
  %v744 = vpop.f32.mrb[0].mxu0
  %v745 = vadd.f32 %v429, %v744
  %v746 = vpop.f32.mrb[0].mxu0
  %747 = vmatprep.mubr.f32.mxu0 0.0
  %748 = vmatmul.mubr.f32.gmra.mrb[0].mxu0 %v526
  %v749 = vpop.f32.mrb[0].mxu0
  %v750 = vadd.f32 %v429, %v749
  %v751 = vpop.f32.mrb[0].mxu0
  %752 = vdwg.mxu0
  %v753 = vmax.f32 %v595, 0.0
  %v754 = vmax.f32 %v600, 0.0
  %v755 = vmax.f32 %v605, 0.0
  %v756 = vmax.f32 %v610, 0.0
  %v757 = vmax.f32 %v615, 0.0
  %v758 = vmax.f32 %v620, 0.0
  %v759 = vmax.f32 %v625, 0.0
  %v760 = vmax.f32 %v630, 0.0
  %v761 = vmax.f32 %v635, 0.0
  %v762 = vmax.f32 %v640, 0.0
  %v763 = vmax.f32 %v645, 0.0
  %v764 = vmax.f32 %v650, 0.0
  %v765 = vmax.f32 %v655, 0.0
  %v766 = vmax.f32 %v660, 0.0
  %v767 = vmax.f32 %v665, 0.0
  %v768 = vmax.f32 %v670, 0.0
  %v769 = vmax.f32 %v675, 0.0
  %v770 = vmax.f32 %v680, 0.0
  %v771 = vmax.f32 %v685, 0.0
  %v772 = vmax.f32 %v690, 0.0
  %v773 = vmax.f32 %v695, 0.0
  %v774 = vmax.f32 %v700, 0.0
  %v775 = vmax.f32 %v705, 0.0
  %v776 = vmax.f32 %v710, 0.0
  %v777 = vmax.f32 %v715, 0.0
  %v778 = vmax.f32 %v720, 0.0
  %v779 = vmax.f32 %v725, 0.0
  %v780 = vmax.f32 %v730, 0.0
  %v781 = vmax.f32 %v735, 0.0
  %v782 = vmax.f32 %v740, 0.0
  %v783 = vmax.f32 %v745, 0.0
  %v784 = vmax.f32 %v750, 0.0
  %v785 = vsel %vm431, %v753, -inf
  %v786 = vsel %vm431, %v754, -inf
  %v787 = vmax.f32 %v785, %v786
  %v788 = vrot.slane %v787, 4
  %v789 = vmax.f32 %v787, %v788
  %v790 = vrot.slane %v789, 2
  %v791 = vmax.f32 %v789, %v790
  %v792 = vrot.slane %v791, 1
  %v793 = vmax.f32 %v791, %v792
  %v794 = vsel %vm431, %v755, -inf
  %v795 = vsel %vm431, %v756, -inf
  %v796 = vmax.f32 %v794, %v795
  %v797 = vrot.slane %v796, 4
  %v798 = vmax.f32 %v796, %v797
  %v799 = vrot.slane %v798, 2
  %v800 = vmax.f32 %v798, %v799
  %v801 = vrot.slane %v800, 1
  %v802 = vmax.f32 %v800, %v801
  %v803 = vsel %vm431, %v757, -inf
  %v804 = vsel %vm431, %v758, -inf
  %v805 = vmax.f32 %v803, %v804
  %v806 = vrot.slane %v805, 4
  %v807 = vmax.f32 %v805, %v806
  %v808 = vrot.slane %v807, 2
  %v809 = vmax.f32 %v807, %v808
  %v810 = vrot.slane %v809, 1
  %v811 = vmax.f32 %v809, %v810
  %v812 = vsel %vm431, %v759, -inf
  %v813 = vsel %vm431, %v760, -inf
  %v814 = vmax.f32 %v812, %v813
  %v815 = vrot.slane %v814, 4
  %v816 = vmax.f32 %v814, %v815
  %v817 = vrot.slane %v816, 2
  %v818 = vmax.f32 %v816, %v817
  %v819 = vrot.slane %v818, 1
  %v820 = vmax.f32 %v818, %v819
  %v821 = vsel %vm431, %v761, -inf
  %v822 = vsel %vm431, %v762, -inf
  %v823 = vmax.f32 %v821, %v822
  %v824 = vrot.slane %v823, 4
  %v825 = vmax.f32 %v823, %v824
  %v826 = vrot.slane %v825, 2
  %v827 = vmax.f32 %v825, %v826
  %v828 = vrot.slane %v827, 1
  %v829 = vmax.f32 %v827, %v828
  %v830 = vsel %vm431, %v763, -inf
  %v831 = vsel %vm431, %v764, -inf
  %v832 = vmax.f32 %v830, %v831
  %v833 = vrot.slane %v832, 4
  %v834 = vmax.f32 %v832, %v833
  %v835 = vrot.slane %v834, 2
  %v836 = vmax.f32 %v834, %v835
  %v837 = vrot.slane %v836, 1
  %v838 = vmax.f32 %v836, %v837
  %v839 = vsel %vm431, %v765, -inf
  %v840 = vsel %vm431, %v766, -inf
  %v841 = vmax.f32 %v839, %v840
  %v842 = vrot.slane %v841, 4
  %v843 = vmax.f32 %v841, %v842
  %v844 = vrot.slane %v843, 2
  %v845 = vmax.f32 %v843, %v844
  %v846 = vrot.slane %v845, 1
  %v847 = vmax.f32 %v845, %v846
  %v848 = vsel %vm431, %v767, -inf
  %v849 = vsel %vm431, %v768, -inf
  %v850 = vmax.f32 %v848, %v849
  %v851 = vrot.slane %v850, 4
  %v852 = vmax.f32 %v850, %v851
  %v853 = vrot.slane %v852, 2
  %v854 = vmax.f32 %v852, %v853
  %v855 = vrot.slane %v854, 1
  %v856 = vmax.f32 %v854, %v855
  %v857 = vsel %vm431, %v769, -inf
  %v858 = vsel %vm431, %v770, -inf
  %v859 = vmax.f32 %v857, %v858
  %v860 = vrot.slane %v859, 4
  %v861 = vmax.f32 %v859, %v860
  %v862 = vrot.slane %v861, 2
  %v863 = vmax.f32 %v861, %v862
  %v864 = vrot.slane %v863, 1
  %v865 = vmax.f32 %v863, %v864
  %v866 = vsel %vm431, %v771, -inf
  %v867 = vsel %vm431, %v772, -inf
  %v868 = vmax.f32 %v866, %v867
  %v869 = vrot.slane %v868, 4
  %v870 = vmax.f32 %v868, %v869
  %v871 = vrot.slane %v870, 2
  %v872 = vmax.f32 %v870, %v871
  %v873 = vrot.slane %v872, 1
  %v874 = vmax.f32 %v872, %v873
  %v875 = vsel %vm431, %v773, -inf
  %v876 = vsel %vm431, %v774, -inf
  %v877 = vmax.f32 %v875, %v876
  %v878 = vrot.slane %v877, 4
  %v879 = vmax.f32 %v877, %v878
  %v880 = vrot.slane %v879, 2
  %v881 = vmax.f32 %v879, %v880
  %v882 = vrot.slane %v881, 1
  %v883 = vmax.f32 %v881, %v882
  %v884 = vsel %vm431, %v775, -inf
  %v885 = vsel %vm431, %v776, -inf
  %v886 = vmax.f32 %v884, %v885
  %v887 = vrot.slane %v886, 4
  %v888 = vmax.f32 %v886, %v887
  %v889 = vrot.slane %v888, 2
  %v890 = vmax.f32 %v888, %v889
  %v891 = vrot.slane %v890, 1
  %v892 = vmax.f32 %v890, %v891
  %v893 = vsel %vm431, %v777, -inf
  %v894 = vsel %vm431, %v778, -inf
  %v895 = vmax.f32 %v893, %v894
  %v896 = vrot.slane %v895, 4
  %v897 = vmax.f32 %v895, %v896
  %v898 = vrot.slane %v897, 2
  %v899 = vmax.f32 %v897, %v898
  %v900 = vrot.slane %v899, 1
  %v901 = vmax.f32 %v899, %v900
  %v902 = vsel %vm431, %v779, -inf
  %v903 = vsel %vm431, %v780, -inf
  %v904 = vmax.f32 %v902, %v903
  %v905 = vrot.slane %v904, 4
  %v906 = vmax.f32 %v904, %v905
  %v907 = vrot.slane %v906, 2
  %v908 = vmax.f32 %v906, %v907
  %v909 = vrot.slane %v908, 1
  %v910 = vmax.f32 %v908, %v909
  %v911 = vsel %vm431, %v781, -inf
  %v912 = vsel %vm431, %v782, -inf
  %v913 = vmax.f32 %v911, %v912
  %v914 = vrot.slane %v913, 4
  %v915 = vmax.f32 %v913, %v914
  %v916 = vrot.slane %v915, 2
  %v917 = vmax.f32 %v915, %v916
  %v918 = vrot.slane %v917, 1
  %v919 = vmax.f32 %v917, %v918
  %v920 = vsel %vm431, %v783, -inf
  %v921 = vsel %vm431, %v784, -inf
  %v922 = vmax.f32 %v920, %v921
  %v923 = vrot.slane %v922, 4
  %v924 = vmax.f32 %v922, %v923
  %v925 = vrot.slane %v924, 2
  %v926 = vmax.f32 %v924, %v925
  %v927 = vrot.slane %v926, 1
  %v928 = vmax.f32 %v926, %v927
  %vm945 = vcmask 1041409
  %v946 = vsel %vm945, %v802, %v793
  %vm947 = vcmask 1042434
  %v948 = vsel %vm947, %v811, %v946
  %vm949 = vcmask 1043459
  %v950 = vsel %vm949, %v820, %v948
  %vm951 = vcmask 1044484
  %v952 = vsel %vm951, %v829, %v950
  %vm953 = vcmask 1045509
  %v954 = vsel %vm953, %v838, %v952
  %vm955 = vcmask 1046534
  %v956 = vsel %vm955, %v847, %v954
  %vm957 = vcmask 1047559
  %v958 = vsel %vm957, %v856, %v956
  %v959 = vsel %vm945, %v874, %v865
  %v960 = vsel %vm947, %v883, %v959
  %v961 = vsel %vm949, %v892, %v960
  %v962 = vsel %vm951, %v901, %v961
  %v963 = vsel %vm953, %v910, %v962
  %v964 = vsel %vm955, %v919, %v963
  %v965 = vsel %vm957, %v928, %v964
  %968 = vst.msk [vmem:[%s6] sm:$0xff] %vm431, %v958
  %969 = vst.msk [vmem:[%s6 + $0x8] sm:$0xff] %vm431, %v965
  %v970 = vmax.f32 %v787, %v794
  %v971 = vmax.f32 %v970, %v795
  %v972 = vmax.f32 %v971, %v803
  %v973 = vmax.f32 %v972, %v804
  %v974 = vmax.f32 %v973, %v812
  %v975 = vmax.f32 %v974, %v813
  %v976 = vrot.slane %v975, 4
  %v977 = vmax.f32 %v975, %v976
  %v978 = vrot.slane %v977, 2
  %v979 = vmax.f32 %v977, %v978
  %v980 = vrot.slane %v979, 1
  %v981 = vmax.f32 %v979, %v980
  %v982 = vmax.f32 %v823, %v830
  %v983 = vmax.f32 %v982, %v831
  %v984 = vmax.f32 %v983, %v839
  %v985 = vmax.f32 %v984, %v840
  %v986 = vmax.f32 %v985, %v848
  %v987 = vmax.f32 %v986, %v849
  %v988 = vrot.slane %v987, 4
  %v989 = vmax.f32 %v987, %v988
  %v990 = vrot.slane %v989, 2
  %v991 = vmax.f32 %v989, %v990
  %v992 = vrot.slane %v991, 1
  %v993 = vmax.f32 %v991, %v992
  %v994 = vmax.f32 %v859, %v866
  %v995 = vmax.f32 %v994, %v867
  %v996 = vmax.f32 %v995, %v875
  %v997 = vmax.f32 %v996, %v876
  %v998 = vmax.f32 %v997, %v884
  %v999 = vmax.f32 %v998, %v885
  %v1000 = vrot.slane %v999, 4
  %v1001 = vmax.f32 %v999, %v1000
  %v1002 = vrot.slane %v1001, 2
  %v1003 = vmax.f32 %v1001, %v1002
  %v1004 = vrot.slane %v1003, 1
  %v1005 = vmax.f32 %v1003, %v1004
  %v1006 = vmax.f32 %v895, %v902
  %v1007 = vmax.f32 %v1006, %v903
  %v1008 = vmax.f32 %v1007, %v911
  %v1009 = vmax.f32 %v1008, %v912
  %v1010 = vmax.f32 %v1009, %v920
  %v1011 = vmax.f32 %v1010, %v921
  %v1012 = vrot.slane %v1011, 4
  %v1013 = vmax.f32 %v1011, %v1012
  %v1014 = vrot.slane %v1013, 2
  %v1015 = vmax.f32 %v1013, %v1014
  %v1016 = vrot.slane %v1015, 1
  %v1017 = vmax.f32 %v1015, %v1016
  %v1022 = vsel %vm945, %v993, %v981
  %v1023 = vsel %vm947, %v1005, %v1022
  %v1024 = vsel %vm949, %v1017, %v1023
  %vm1026 = vcmask 257024
  %1027 = vst.msk [vmem:[%s5] sm:$0xf] %vm1026, %v1024
  // Predicated region
  $region22: #{sim_attention_3_forward.4} parent=0 // pred_check
    _
  $region23: #{sim_attention_3_forward.4} parent=0 // pred_check_branch
    %1029 = sbr.rel (0) target = $region25
  $region24: #{sim_attention_3_forward.4} parent=0 // pred_region
    _
  $region25: #{sim_attention_3_forward.4} parent=0 // pred_fallthru
    _
  // Predicated region
  $region26: #{sim_attention_3_forward.4} parent=0 // pred_check
    _
  $region27: #{sim_attention_3_forward.4} parent=0 // pred_check_branch
    %1031 = sbr.rel (0) target = $region29
  $region28: #{sim_attention_3_forward.4} parent=0 // pred_region
    _
  $region29: #{sim_attention_3_forward.4} parent=0 // pred_fallthru
    _
  // Predicated region
  $region30: #{sim_attention_3_forward.4} parent=0 // pred_check
    _
  $region31: #{sim_attention_3_forward.4} parent=0 // pred_check_branch
    %1033 = sbr.rel (0) target = $region33
  $region32: #{sim_attention_3_forward.4} parent=0 // pred_region
    _
  $region33: #{sim_attention_3_forward.4} parent=0 // pred_fallthru
    _
  // Predicated region
  $region34: #{sim_attention_3_forward.4} parent=0 // pred_check
    _
  $region35: #{sim_attention_3_forward.4} parent=0 // pred_check_branch
    %1035 = sbr.rel (0) target = $region37
  $region36: #{sim_attention_3_forward.4} parent=0 // pred_region
    _
  $region37: #{sim_attention_3_forward.4} parent=0 // pred_fallthru
    _

// kernel: sim_attention_3_forward.7
$region0: #{sim_attention_3_forward.7}
  #allocation0 [shape = 'u32[]', space=smem, size = 0x4, offset = 0x4, fixed_abs, tag = 'smem constant byte address 0x4 - core index']
  #allocation1 [shape = 'u32[144,128]{1,0:T(1,128)}', space=vmem, size = 0x12000, scoped, tag = 'internal scratch']
  %s0 = inlined_call_operand.vmem [shape: f32[4,32], index: 0, kind: input, shape index: {}]
  %s1 = inlined_call_operand.vmem [shape: f32[16,32], index: 1, kind: input, shape index: {}]
  %s2 = inlined_call_operand.vmem [shape: f32[32,32], index: 2, kind: input, shape index: {}]
  %s3 = inlined_call_operand.vmem [shape: f32[32,32], index: 3, kind: input, shape index: {}]
  %s4 = inlined_call_operand.vmem [shape: f32[32,32], index: 4, kind: input, shape index: {}]
  %s5 = inlined_call_operand.vmem [shape: f32[32,32], index: 5, kind: input, shape index: {}]
  %s6 = inlined_call_operand.vmem [shape: f32[32,32], index: 6, kind: input, shape index: {}]
  %s7 = inlined_call_operand.vmem [shape: f32[1,32], index: 7, kind: input, shape index: {}]
  %s8 = inlined_call_operand.vmem [shape: f32[32,32], index: 8, kind: input, shape index: {}]
  %s9 = inlined_call_operand.vmem [shape: f32[1,32], index: 9, kind: input, shape index: {}]
  %s10 = inlined_call_operand.vmem [shape: f32[4,32], index: 10, kind: output, shape index: {}]
  %s11 = sld [smem:[#allocation0]]
  $region50: #{sim_attention_3_forward.7} parent=0
    _
  %s13 = ssub.s32 1, %s11
  %s14 = scalar_select 0, %s13, %s11
  // Predicated region
  $region2: #{sim_attention_3_forward.7} parent=0 // pred_check
    _
  $region3: #{sim_attention_3_forward.7} parent=0 // pred_check_branch
    %16 = sbr.rel (0) target = $region5
  $region4: #{sim_attention_3_forward.7} parent=0 // pred_region
    _
  $region5: #{sim_attention_3_forward.7} parent=0 // pred_fallthru
    _
  // Predicated region
  $region6: #{sim_attention_3_forward.7} parent=0 // pred_check
    _
  $region7: #{sim_attention_3_forward.7} parent=0 // pred_check_branch
    %18 = sbr.rel (0) target = $region9
  $region8: #{sim_attention_3_forward.7} parent=0 // pred_region
    _
  $region9: #{sim_attention_3_forward.7} parent=0 // pred_fallthru
    _
  // Predicated region
  $region10: #{sim_attention_3_forward.7} parent=0 // pred_check
    _
  $region11: #{sim_attention_3_forward.7} parent=0 // pred_check_branch
    %20 = sbr.rel (0) target = $region13
  $region12: #{sim_attention_3_forward.7} parent=0 // pred_region
    _
  $region13: #{sim_attention_3_forward.7} parent=0 // pred_fallthru
    _
  // Predicated region
  $region14: #{sim_attention_3_forward.7} parent=0 // pred_check
    _
  $region15: #{sim_attention_3_forward.7} parent=0 // pred_check_branch
    %22 = sbr.rel (0) target = $region17
  $region16: #{sim_attention_3_forward.7} parent=0 // pred_region
    _
  $region17: #{sim_attention_3_forward.7} parent=0 // pred_fallthru
    _
  // Predicated region
  $region18: #{sim_attention_3_forward.7} parent=0 // pred_check
    _
  $region19: #{sim_attention_3_forward.7} parent=0 // pred_check_branch
    %24 = sbr.rel (0) target = $region21
  $region20: #{sim_attention_3_forward.7} parent=0 // pred_region
    _
  $region21: #{sim_attention_3_forward.7} parent=0 // pred_fallthru
    _
  // Predicated region
  $region22: #{sim_attention_3_forward.7} parent=0 // pred_check
    _
  $region23: #{sim_attention_3_forward.7} parent=0 // pred_check_branch
    %26 = sbr.rel (0) target = $region25
  $region24: #{sim_attention_3_forward.7} parent=0 // pred_region
    _
  $region25: #{sim_attention_3_forward.7} parent=0 // pred_fallthru
    _
  // Predicated region
  $region26: #{sim_attention_3_forward.7} parent=0 // pred_check
    _
  $region27: #{sim_attention_3_forward.7} parent=0 // pred_check_branch
    %28 = sbr.rel (0) target = $region29
  $region28: #{sim_attention_3_forward.7} parent=0 // pred_region
    _
  $region29: #{sim_attention_3_forward.7} parent=0 // pred_fallthru
    _
  // Predicated region
  $region30: #{sim_attention_3_forward.7} parent=0 // pred_check
    _
  $region31: #{sim_attention_3_forward.7} parent=0 // pred_check_branch
    %30 = sbr.rel (0) target = $region33
  $region32: #{sim_attention_3_forward.7} parent=0 // pred_region
    _
  $region33: #{sim_attention_3_forward.7} parent=0 // pred_fallthru
    _
  // Predicated region
  $region34: #{sim_attention_3_forward.7} parent=0 // pred_check
    _
  $region35: #{sim_attention_3_forward.7} parent=0 // pred_check_branch
    %32 = sbr.rel (0) target = $region37
  $region36: #{sim_attention_3_forward.7} parent=0 // pred_region
    _
  $region37: #{sim_attention_3_forward.7} parent=0 // pred_fallthru
    _
  // Predicated region
  $region38: #{sim_attention_3_forward.7} parent=0 // pred_check
    _
  $region39: #{sim_attention_3_forward.7} parent=0 // pred_check_branch
    %34 = sbr.rel (0) target = $region41
  $region40: #{sim_attention_3_forward.7} parent=0 // pred_region
    _
  $region41: #{sim_attention_3_forward.7} parent=0 // pred_fallthru
    _
  %v35 = vld [vmem:[%s0] sm:$0xf]
  %v36 = vld [vmem:[%s1] sm:$0xff]
  %v37 = vld [vmem:[%s1 + $0x8] sm:$0xff]
  %v38 = vld [vmem:[%s2] sm:$0xff]
  %v39 = vld [vmem:[%s2 + $0x8] sm:$0xff]
  %v40 = vld [vmem:[%s2 + $0x10] sm:$0xff]
  %v41 = vld [vmem:[%s2 + $0x18] sm:$0xff]
  %v42 = vld [vmem:[%s3] sm:$0xff]
  %v43 = vld [vmem:[%s3 + $0x8] sm:$0xff]
  %v44 = vld [vmem:[%s3 + $0x10] sm:$0xff]
  %v45 = vld [vmem:[%s3 + $0x18] sm:$0xff]
  %v46 = vld [vmem:[%s4] sm:$0xff]
  %v47 = vld [vmem:[%s4 + $0x8] sm:$0xff]
  %v48 = vld [vmem:[%s4 + $0x10] sm:$0xff]
  %v49 = vld [vmem:[%s4 + $0x18] sm:$0xff]
  %v50 = vld [vmem:[%s5] sm:$0xff]
  %v51 = vld [vmem:[%s5 + $0x8] sm:$0xff]
  %v52 = vld [vmem:[%s5 + $0x10] sm:$0xff]
  %v53 = vld [vmem:[%s5 + $0x18] sm:$0xff]
  %v54 = vld [vmem:[%s6] sm:$0xff]
  %v55 = vld [vmem:[%s6 + $0x8] sm:$0xff]
  %v56 = vld [vmem:[%s6 + $0x10] sm:$0xff]
  %v57 = vld [vmem:[%s6 + $0x18] sm:$0xff]
  %v58 = vld [vmem:[%s7] sm:$0x1]
  %v59 = vld [vmem:[%s8] sm:$0xff]
  %v60 = vld [vmem:[%s8 + $0x8] sm:$0xff]
  %v61 = vld [vmem:[%s8 + $0x10] sm:$0xff]
  %v62 = vld [vmem:[%s8 + $0x18] sm:$0xff]
  %v63 = vld [vmem:[%s9] sm:$0x1]
  %vm64 = vcmask 261120
  %v66 = vsel %vm64, %v35, 0
  %68 = vmatprep.subr.mxu0 0.0
  %69 = vmatpush1.msra.mxu0 %v38
  %70 = vmatprep.subr.mxu0 0.0
  %71 = vmatpush1.msra.mxu0 %v39
  %72 = vmatprep.subr.mxu0 0.0
  %73 = vmatpush1.msra.mxu0 %v40
  %74 = vmatprep.subr.mxu0 0.0
  %75 = vmatpush1.msra.mxu0 %v41
  %76 = vmatprep.subr.mxu0 0.0
  %77 = vmatpush1.msra.mxu0 0.0
  %78 = vmatprep.subr.mxu0 0.0
  %79 = vmatpush1.msra.mxu0 0.0
  %80 = vmatprep.subr.mxu0 0.0
  %81 = vmatpush1.msra.mxu0 0.0
  %82 = vmatprep.subr.mxu0 0.0
  %83 = vmatpush1.msra.mxu0 0.0
  %84 = vmatprep.subr.mxu0 0.0
  %85 = vmatpush1.msra.mxu0 0.0
  %86 = vmatprep.subr.mxu0 0.0
  %87 = vmatpush1.msra.mxu0 0.0
  %88 = vmatprep.subr.mxu0 0.0
  %89 = vmatpush1.msra.mxu0 0.0
  %90 = vmatprep.subr.mxu0 0.0
  %91 = vmatpush1.msra.mxu0 0.0
  %92 = vmatprep.subr.mxu0 0.0
  %93 = vmatpush1.msra.mxu0 0.0
  %94 = vmatprep.subr.mxu0 0.0
  %95 = vmatpush1.msra.mxu0 0.0
  %96 = vmatprep.subr.mxu0 0.0
  %97 = vmatpush1.msra.mxu0 0.0
  %98 = vmatprep.subr.mxu0 0.0
  %99 = vmatpush1.msra.mxu0 0.0
  %100 = vmatprep.subr.mxu0 0.0
  %101 = vmatpush1.msra.mxu0 0.0
  %102 = vmatprep.subr.mxu0 0.0
  %103 = vmatpush1.msra.mxu0 0.0
  %104 = vmatprep.subr.mxu0 0.0
  %105 = vmatpush1.msra.mxu0 0.0
  %106 = vmatprep.subr.mxu0 0.0
  %107 = vmatpush1.msra.mxu0 0.0
  %108 = vmatprep.subr.mxu0 0.0
  %109 = vmatpush1.msra.mxu0 0.0
  %110 = vmatprep.subr.mxu0 0.0
  %111 = vmatpush1.msra.mxu0 0.0
  %112 = vmatprep.subr.mxu0 0.0
  %113 = vmatpush1.msra.mxu0 0.0
  %114 = vmatprep.subr.mxu0 0.0
  %115 = vmatpush1.msra.mxu0 0.0
  %116 = vmatprep.subr.mxu0 0.0
  %117 = vmatpush1.msra.mxu0 0.0
  %118 = vmatprep.subr.mxu0 0.0
  %119 = vmatpush1.msra.mxu0 0.0
  %120 = vmatprep.subr.mxu0 0.0
  %121 = vmatpush1.msra.mxu0 0.0
  %122 = vmatprep.subr.mxu0 0.0
  %123 = vmatpush1.msra.mxu0 0.0
  %124 = vmatprep.subr.mxu0 0.0
  %125 = vmatpush1.msra.mxu0 0.0
  %126 = vmatprep.subr.mxu0 0.0
  %127 = vmatpush1.msra.mxu0 0.0
  %128 = vmatprep.subr.mxu0 0.0
  %129 = vmatpush1.msra.mxu0 0.0
  %130 = vmatprep.subr.mxu0 0.0
  %131 = vmatpush1.msra.mxu0 0.0
  %132 = vmatprep.mubr.f32.mxu0 0.0
  %133 = vmatmul.mubr.f32.gmra.mrb[0].mxu0 %v66
  %v134 = vpop.f32.mrb[0].mxu0
  %v135 = vadd.f32 0.0, %v134
  %v136 = vpop.f32.mrb[0].mxu0
  %137 = vdwg.mxu0
  %v139 = vsel %vm64, %v36, 0
  %v142 = vsel %vm64, %v37, 0
  %144 = vmatprep.subr.mxu0 0.0
  %145 = vmatpush1.msra.mxu0 %v42
  %146 = vmatprep.subr.mxu0 0.0
  %147 = vmatpush1.msra.mxu0 %v43
  %148 = vmatprep.subr.mxu0 0.0
  %149 = vmatpush1.msra.mxu0 %v44
  %150 = vmatprep.subr.mxu0 0.0
  %151 = vmatpush1.msra.mxu0 %v45
  %152 = vmatprep.subr.mxu0 0.0
  %153 = vmatpush1.msra.mxu0 0.0
  %154 = vmatprep.subr.mxu0 0.0
  %155 = vmatpush1.msra.mxu0 0.0
  %156 = vmatprep.subr.mxu0 0.0
  %157 = vmatpush1.msra.mxu0 0.0
  %158 = vmatprep.subr.mxu0 0.0
  %159 = vmatpush1.msra.mxu0 0.0
  %160 = vmatprep.subr.mxu0 0.0
  %161 = vmatpush1.msra.mxu0 0.0
  %162 = vmatprep.subr.mxu0 0.0
  %163 = vmatpush1.msra.mxu0 0.0
  %164 = vmatprep.subr.mxu0 0.0
  %165 = vmatpush1.msra.mxu0 0.0
  %166 = vmatprep.subr.mxu0 0.0
  %167 = vmatpush1.msra.mxu0 0.0
  %168 = vmatprep.subr.mxu0 0.0
  %169 = vmatpush1.msra.mxu0 0.0
  %170 = vmatprep.subr.mxu0 0.0
  %171 = vmatpush1.msra.mxu0 0.0
  %172 = vmatprep.subr.mxu0 0.0
  %173 = vmatpush1.msra.mxu0 0.0
  %174 = vmatprep.subr.mxu0 0.0
  %175 = vmatpush1.msra.mxu0 0.0
  %176 = vmatprep.subr.mxu0 0.0
  %177 = vmatpush1.msra.mxu0 0.0
  %178 = vmatprep.subr.mxu0 0.0
  %179 = vmatpush1.msra.mxu0 0.0
  %180 = vmatprep.subr.mxu0 0.0
  %181 = vmatpush1.msra.mxu0 0.0
  %182 = vmatprep.subr.mxu0 0.0
  %183 = vmatpush1.msra.mxu0 0.0
  %184 = vmatprep.subr.mxu0 0.0
  %185 = vmatpush1.msra.mxu0 0.0
  %186 = vmatprep.subr.mxu0 0.0
  %187 = vmatpush1.msra.mxu0 0.0
  %188 = vmatprep.subr.mxu0 0.0
  %189 = vmatpush1.msra.mxu0 0.0
  %190 = vmatprep.subr.mxu0 0.0
  %191 = vmatpush1.msra.mxu0 0.0
  %192 = vmatprep.subr.mxu0 0.0
  %193 = vmatpush1.msra.mxu0 0.0
  %194 = vmatprep.subr.mxu0 0.0
  %195 = vmatpush1.msra.mxu0 0.0
  %196 = vmatprep.subr.mxu0 0.0
  %197 = vmatpush1.msra.mxu0 0.0
  %198 = vmatprep.subr.mxu0 0.0
  %199 = vmatpush1.msra.mxu0 0.0
  %200 = vmatprep.subr.mxu0 0.0
  %201 = vmatpush1.msra.mxu0 0.0
  %202 = vmatprep.subr.mxu0 0.0
  %203 = vmatpush1.msra.mxu0 0.0
  %204 = vmatprep.subr.mxu0 0.0
  %205 = vmatpush1.msra.mxu0 0.0
  %206 = vmatprep.subr.mxu0 0.0
  %207 = vmatpush1.msra.mxu0 0.0
  %208 = vmatprep.mubr.f32.mxu0 0.0
  %209 = vmatmul.mubr.f32.gmra.mrb[0].mxu0 %v139
  %v210 = vpop.f32.mrb[0].mxu0
  %v211 = vadd.f32 0.0, %v210
  %v212 = vpop.f32.mrb[0].mxu0
  %213 = vmatprep.mubr.f32.mxu0 0.0
  %214 = vmatmul.mubr.f32.gmra.mrb[0].mxu0 %v142
  %v215 = vpop.f32.mrb[0].mxu0
  %v216 = vadd.f32 0.0, %v215
  %v217 = vpop.f32.mrb[0].mxu0
  %218 = vdwg.mxu0
  %219 = vmatprep.subr.mxu0 0.0
  %220 = vmatpush1.msra.mxu0 %v46
  %221 = vmatprep.subr.mxu0 0.0
  %222 = vmatpush1.msra.mxu0 %v47
  %223 = vmatprep.subr.mxu0 0.0
  %224 = vmatpush1.msra.mxu0 %v48
  %225 = vmatprep.subr.mxu0 0.0
  %226 = vmatpush1.msra.mxu0 %v49
  %227 = vmatprep.subr.mxu0 0.0
  %228 = vmatpush1.msra.mxu0 0.0
  %229 = vmatprep.subr.mxu0 0.0
  %230 = vmatpush1.msra.mxu0 0.0
  %231 = vmatprep.subr.mxu0 0.0
  %232 = vmatpush1.msra.mxu0 0.0
  %233 = vmatprep.subr.mxu0 0.0
  %234 = vmatpush1.msra.mxu0 0.0
  %235 = vmatprep.subr.mxu0 0.0
  %236 = vmatpush1.msra.mxu0 0.0
  %237 = vmatprep.subr.mxu0 0.0
  %238 = vmatpush1.msra.mxu0 0.0
  %239 = vmatprep.subr.mxu0 0.0
  %240 = vmatpush1.msra.mxu0 0.0
  %241 = vmatprep.subr.mxu0 0.0
  %242 = vmatpush1.msra.mxu0 0.0
  %243 = vmatprep.subr.mxu0 0.0
  %244 = vmatpush1.msra.mxu0 0.0
  %245 = vmatprep.subr.mxu0 0.0
  %246 = vmatpush1.msra.mxu0 0.0
  %247 = vmatprep.subr.mxu0 0.0
  %248 = vmatpush1.msra.mxu0 0.0
  %249 = vmatprep.subr.mxu0 0.0
  %250 = vmatpush1.msra.mxu0 0.0
  %251 = vmatprep.subr.mxu0 0.0
  %252 = vmatpush1.msra.mxu0 0.0
  %253 = vmatprep.subr.mxu0 0.0
  %254 = vmatpush1.msra.mxu0 0.0
  %255 = vmatprep.subr.mxu0 0.0
  %256 = vmatpush1.msra.mxu0 0.0
  %257 = vmatprep.subr.mxu0 0.0
  %258 = vmatpush1.msra.mxu0 0.0
  %259 = vmatprep.subr.mxu0 0.0
  %260 = vmatpush1.msra.mxu0 0.0
  %261 = vmatprep.subr.mxu0 0.0
  %262 = vmatpush1.msra.mxu0 0.0
  %263 = vmatprep.subr.mxu0 0.0
  %264 = vmatpush1.msra.mxu0 0.0
  %265 = vmatprep.subr.mxu0 0.0
  %266 = vmatpush1.msra.mxu0 0.0
  %267 = vmatprep.subr.mxu0 0.0
  %268 = vmatpush1.msra.mxu0 0.0
  %269 = vmatprep.subr.mxu0 0.0
  %270 = vmatpush1.msra.mxu0 0.0
  %271 = vmatprep.subr.mxu0 0.0
  %272 = vmatpush1.msra.mxu0 0.0
  %273 = vmatprep.subr.mxu0 0.0
  %274 = vmatpush1.msra.mxu0 0.0
  %275 = vmatprep.subr.mxu0 0.0
  %276 = vmatpush1.msra.mxu0 0.0
  %277 = vmatprep.subr.mxu0 0.0
  %278 = vmatpush1.msra.mxu0 0.0
  %279 = vmatprep.subr.mxu0 0.0
  %280 = vmatpush1.msra.mxu0 0.0
  %281 = vmatprep.subr.mxu0 0.0
  %282 = vmatpush1.msra.mxu0 0.0
  %283 = vmatprep.mubr.f32.mxu0 0.0
  %284 = vmatmul.mubr.f32.gmra.mrb[0].mxu0 %v139
  %v285 = vpop.f32.mrb[0].mxu0
  %v286 = vadd.f32 0.0, %v285
  %v287 = vpop.f32.mrb[0].mxu0
  %288 = vmatprep.mubr.f32.mxu0 0.0
  %289 = vmatmul.mubr.f32.gmra.mrb[0].mxu0 %v142
  %v290 = vpop.f32.mrb[0].mxu0
  %v291 = vadd.f32 0.0, %v290
  %v292 = vpop.f32.mrb[0].mxu0
  %293 = vdwg.mxu0
  %v295 = vsel %vm64, %v135, 0
  %v298 = vsel %vm64, %v211, 0
  %v301 = vsel %vm64, %v216, 0
  %303 = vmatprep.subr.mxu0 0.0
  %304 = vmatpush1.xpose.msra.mxu0 %v298
  %305 = vmatprep.subr.mxu0 0.0
  %306 = vmatpush1.xpose.msra.mxu0 %v301
  %307 = vmatprep.subr.mxu0 0.0
  %308 = vmatpush1.xpose.msra.mxu0 0.0
  %309 = vmatprep.subr.mxu0 0.0
  %310 = vmatpush1.xpose.msra.mxu0 0.0
  %311 = vmatprep.subr.mxu0 0.0
  %312 = vmatpush1.xpose.msra.mxu0 0.0
  %313 = vmatprep.subr.mxu0 0.0
  %314 = vmatpush1.xpose.msra.mxu0 0.0
  %315 = vmatprep.subr.mxu0 0.0
  %316 = vmatpush1.xpose.msra.mxu0 0.0
  %317 = vmatprep.subr.mxu0 0.0
  %318 = vmatpush1.xpose.msra.mxu0 0.0
  %319 = vmatprep.subr.mxu0 0.0
  %320 = vmatpush1.xpose.msra.mxu0 0.0
  %321 = vmatprep.subr.mxu0 0.0
  %322 = vmatpush1.xpose.msra.mxu0 0.0
  %323 = vmatprep.subr.mxu0 0.0
  %324 = vmatpush1.xpose.msra.mxu0 0.0
  %325 = vmatprep.subr.mxu0 0.0
  %326 = vmatpush1.xpose.msra.mxu0 0.0
  %327 = vmatprep.subr.mxu0 0.0
  %328 = vmatpush1.xpose.msra.mxu0 0.0
  %329 = vmatprep.subr.mxu0 0.0
  %330 = vmatpush1.xpose.msra.mxu0 0.0
  %331 = vmatprep.subr.mxu0 0.0
  %332 = vmatpush1.xpose.msra.mxu0 0.0
  %333 = vmatprep.subr.mxu0 0.0
  %334 = vmatpush1.xpose.msra.mxu0 0.0
  %335 = vmatprep.subr.mxu0 0.0
  %336 = vmatpush1.xpose.msra.mxu0 0.0
  %337 = vmatprep.subr.mxu0 0.0
  %338 = vmatpush1.xpose.msra.mxu0 0.0
  %339 = vmatprep.subr.mxu0 0.0
  %340 = vmatpush1.xpose.msra.mxu0 0.0
  %341 = vmatprep.subr.mxu0 0.0
  %342 = vmatpush1.xpose.msra.mxu0 0.0
  %343 = vmatprep.subr.mxu0 0.0
  %344 = vmatpush1.xpose.msra.mxu0 0.0
  %345 = vmatprep.subr.mxu0 0.0
  %346 = vmatpush1.xpose.msra.mxu0 0.0
  %347 = vmatprep.subr.mxu0 0.0
  %348 = vmatpush1.xpose.msra.mxu0 0.0
  %349 = vmatprep.subr.mxu0 0.0
  %350 = vmatpush1.xpose.msra.mxu0 0.0
  %351 = vmatprep.subr.mxu0 0.0
  %352 = vmatpush1.xpose.msra.mxu0 0.0
  %353 = vmatprep.subr.mxu0 0.0
  %354 = vmatpush1.xpose.msra.mxu0 0.0
  %355 = vmatprep.subr.mxu0 0.0
  %356 = vmatpush1.xpose.msra.mxu0 0.0
  %357 = vmatprep.subr.mxu0 0.0
  %358 = vmatpush1.xpose.msra.mxu0 0.0
  %359 = vmatprep.subr.mxu0 0.0
  %360 = vmatpush1.xpose.msra.mxu0 0.0
  %361 = vmatprep.subr.mxu0 0.0
  %362 = vmatpush1.xpose.msra.mxu0 0.0
  %363 = vmatprep.subr.mxu0 0.0
  %364 = vmatpush1.xpose.msra.mxu0 0.0
  %365 = vmatprep.subr.mxu0 0.0
  %366 = vmatpush1.xpose.msra.mxu0 0.0
  %367 = vmatprep.mubr.f32.mxu0 0.0
  %368 = vmatmul.mubr.f32.gmra.mrb[0].mxu0 %v295
  %v369 = vpop.f32.mrb[0].mxu0
  %v370 = vadd.f32 0.0, %v369
  %v371 = vpop.f32.mrb[0].mxu0
  %372 = vdwg.mxu0
  %v373 = vmul.f32 %v370, 0.17677669
  %v374 = vlaneseq
  %v375 = vshrl.u32 %v374, 7
  %v376 = vlaneseq
  %v377 = vand.u32 %v376, 127
  %v378 = vmul.u32 %v375, 4
  %vm379 = vcmp.ge.s32.totalorder %v377, %v378
  %v380 = vadd.s32 %v375, 1
  %v381 = vmul.u32 %v380, 4
  %vm382 = vcmp.lt.s32.totalorder %v377, %v381
  %vm383 = vmand %vm379, %vm382
  %v384 = vsel %vm383, %v373, -inf
  %vm385 = vcmask 125952
  %v386 = vsel %vm385, %v384, -inf
  %387 = vmax.xlane.f32.xlu0 %v386
  %v388 = vpop.xlane.xlu0 %387
  %v389 = vsub.f32 %v384, %v388
  %v390 = vmul.f32 %v389, 1.442695
  %v391 = vpow.pop %v390
  %v392 = vsel %vm385, %v391, 0.0
  %393 = vadd.xlane.f32.xlu0 %v392
  %v394 = vpop.xlane.xlu0 %393
  %v395 = vrcp.pop %v394
  %v396 = vmul.f32 %v391, %v395
  %vm397 = vcmask 130048
  %v399 = vsel %vm397, %v396, 0
  %401 = vmatprep.subr.mxu0 0.0
  %402 = vmatpush1.msra.mxu0 %v286
  %403 = vmatprep.subr.mxu0 0.0
  %404 = vmatpush1.msra.mxu0 %v291
  %405 = vmatprep.subr.mxu0 0.0
  %406 = vmatpush1.msra.mxu0 0.0
  %407 = vmatprep.subr.mxu0 0.0
  %408 = vmatpush1.msra.mxu0 0.0
  %409 = vmatprep.subr.mxu0 0.0
  %410 = vmatpush1.msra.mxu0 0.0
  %411 = vmatprep.subr.mxu0 0.0
  %412 = vmatpush1.msra.mxu0 0.0
  %413 = vmatprep.subr.mxu0 0.0
  %414 = vmatpush1.msra.mxu0 0.0
  %415 = vmatprep.subr.mxu0 0.0
  %416 = vmatpush1.msra.mxu0 0.0
  %417 = vmatprep.subr.mxu0 0.0
  %418 = vmatpush1.msra.mxu0 0.0
  %419 = vmatprep.subr.mxu0 0.0
  %420 = vmatpush1.msra.mxu0 0.0
  %421 = vmatprep.subr.mxu0 0.0
  %422 = vmatpush1.msra.mxu0 0.0
  %423 = vmatprep.subr.mxu0 0.0
  %424 = vmatpush1.msra.mxu0 0.0
  %425 = vmatprep.subr.mxu0 0.0
  %426 = vmatpush1.msra.mxu0 0.0
  %427 = vmatprep.subr.mxu0 0.0
  %428 = vmatpush1.msra.mxu0 0.0
  %429 = vmatprep.subr.mxu0 0.0
  %430 = vmatpush1.msra.mxu0 0.0
  %431 = vmatprep.subr.mxu0 0.0
  %432 = vmatpush1.msra.mxu0 0.0
  %433 = vmatprep.subr.mxu0 0.0
  %434 = vmatpush1.msra.mxu0 0.0
  %435 = vmatprep.subr.mxu0 0.0
  %436 = vmatpush1.msra.mxu0 0.0
  %437 = vmatprep.subr.mxu0 0.0
  %438 = vmatpush1.msra.mxu0 0.0
  %439 = vmatprep.subr.mxu0 0.0
  %440 = vmatpush1.msra.mxu0 0.0
  %441 = vmatprep.subr.mxu0 0.0
  %442 = vmatpush1.msra.mxu0 0.0
  %443 = vmatprep.subr.mxu0 0.0
  %444 = vmatpush1.msra.mxu0 0.0
  %445 = vmatprep.subr.mxu0 0.0
  %446 = vmatpush1.msra.mxu0 0.0
  %447 = vmatprep.subr.mxu0 0.0
  %448 = vmatpush1.msra.mxu0 0.0
  %449 = vmatprep.subr.mxu0 0.0
  %450 = vmatpush1.msra.mxu0 0.0
  %451 = vmatprep.subr.mxu0 0.0
  %452 = vmatpush1.msra.mxu0 0.0
  %453 = vmatprep.subr.mxu0 0.0
  %454 = vmatpush1.msra.mxu0 0.0
  %455 = vmatprep.subr.mxu0 0.0
  %456 = vmatpush1.msra.mxu0 0.0
  %457 = vmatprep.subr.mxu0 0.0
  %458 = vmatpush1.msra.mxu0 0.0
  %459 = vmatprep.subr.mxu0 0.0
  %460 = vmatpush1.msra.mxu0 0.0
  %461 = vmatprep.subr.mxu0 0.0
  %462 = vmatpush1.msra.mxu0 0.0
  %463 = vmatprep.subr.mxu0 0.0
  %464 = vmatpush1.msra.mxu0 0.0
  %465 = vmatprep.mubr.f32.mxu0 0.0
  %466 = vmatmul.mubr.f32.gmra.mrb[0].mxu0 %v399
  %v467 = vpop.f32.mrb[0].mxu0
  %v468 = vadd.f32 0.0, %v467
  %v469 = vpop.f32.mrb[0].mxu0
  %470 = vdwg.mxu0
  %v472 = vsel %vm64, %v468, 0
  %474 = vmatprep.subr.mxu0 0.0
  %475 = vmatpush1.msra.mxu0 %v50
  %476 = vmatprep.subr.mxu0 0.0
  %477 = vmatpush1.msra.mxu0 %v51
  %478 = vmatprep.subr.mxu0 0.0
  %479 = vmatpush1.msra.mxu0 %v52
  %480 = vmatprep.subr.mxu0 0.0
  %481 = vmatpush1.msra.mxu0 %v53
  %482 = vmatprep.subr.mxu0 0.0
  %483 = vmatpush1.msra.mxu0 0.0
  %484 = vmatprep.subr.mxu0 0.0
  %485 = vmatpush1.msra.mxu0 0.0
  %486 = vmatprep.subr.mxu0 0.0
  %487 = vmatpush1.msra.mxu0 0.0
  %488 = vmatprep.subr.mxu0 0.0
  %489 = vmatpush1.msra.mxu0 0.0
  %490 = vmatprep.subr.mxu0 0.0
  %491 = vmatpush1.msra.mxu0 0.0
  %492 = vmatprep.subr.mxu0 0.0
  %493 = vmatpush1.msra.mxu0 0.0
  %494 = vmatprep.subr.mxu0 0.0
  %495 = vmatpush1.msra.mxu0 0.0
  %496 = vmatprep.subr.mxu0 0.0
  %497 = vmatpush1.msra.mxu0 0.0
  %498 = vmatprep.subr.mxu0 0.0
  %499 = vmatpush1.msra.mxu0 0.0
  %500 = vmatprep.subr.mxu0 0.0
  %501 = vmatpush1.msra.mxu0 0.0
  %502 = vmatprep.subr.mxu0 0.0
  %503 = vmatpush1.msra.mxu0 0.0
  %504 = vmatprep.subr.mxu0 0.0
  %505 = vmatpush1.msra.mxu0 0.0
  %506 = vmatprep.subr.mxu0 0.0
  %507 = vmatpush1.msra.mxu0 0.0
  %508 = vmatprep.subr.mxu0 0.0
  %509 = vmatpush1.msra.mxu0 0.0
  %510 = vmatprep.subr.mxu0 0.0
  %511 = vmatpush1.msra.mxu0 0.0
  %512 = vmatprep.subr.mxu0 0.0
  %513 = vmatpush1.msra.mxu0 0.0
  %514 = vmatprep.subr.mxu0 0.0
  %515 = vmatpush1.msra.mxu0 0.0
  %516 = vmatprep.subr.mxu0 0.0
  %517 = vmatpush1.msra.mxu0 0.0
  %518 = vmatprep.subr.mxu0 0.0
  %519 = vmatpush1.msra.mxu0 0.0
  %520 = vmatprep.subr.mxu0 0.0
  %521 = vmatpush1.msra.mxu0 0.0
  %522 = vmatprep.subr.mxu0 0.0
  %523 = vmatpush1.msra.mxu0 0.0
  %524 = vmatprep.subr.mxu0 0.0
  %525 = vmatpush1.msra.mxu0 0.0
  %526 = vmatprep.subr.mxu0 0.0
  %527 = vmatpush1.msra.mxu0 0.0
  %528 = vmatprep.subr.mxu0 0.0
  %529 = vmatpush1.msra.mxu0 0.0
  %530 = vmatprep.subr.mxu0 0.0
  %531 = vmatpush1.msra.mxu0 0.0
  %532 = vmatprep.subr.mxu0 0.0
  %533 = vmatpush1.msra.mxu0 0.0
  %534 = vmatprep.subr.mxu0 0.0
  %535 = vmatpush1.msra.mxu0 0.0
  %536 = vmatprep.subr.mxu0 0.0
  %537 = vmatpush1.msra.mxu0 0.0
  %538 = vmatprep.mubr.f32.mxu0 0.0
  %539 = vmatmul.mubr.f32.gmra.mrb[0].mxu0 %v472
  %v540 = vpop.f32.mrb[0].mxu0
  %v541 = vadd.f32 0.0, %v540
  %v542 = vpop.f32.mrb[0].mxu0
  %543 = vdwg.mxu0
  %v544 = vadd.f32 %v35, %v541
  %v546 = vlaneseq
  %v547 = vshrl.u32 %v546, 7
  %v548 = vsub.s32 0, %v547
  %v549 = vrot.slane %v58, %v548
  %v552 = vsel %vm64, %v544, 0
  %554 = vmatprep.subr.mxu0 0.0
  %555 = vmatpush1.msra.mxu0 %v54
  %556 = vmatprep.subr.mxu0 0.0
  %557 = vmatpush1.msra.mxu0 %v55
  %558 = vmatprep.subr.mxu0 0.0
  %559 = vmatpush1.msra.mxu0 %v56
  %560 = vmatprep.subr.mxu0 0.0
  %561 = vmatpush1.msra.mxu0 %v57
  %562 = vmatprep.subr.mxu0 0.0
  %563 = vmatpush1.msra.mxu0 0.0
  %564 = vmatprep.subr.mxu0 0.0
  %565 = vmatpush1.msra.mxu0 0.0
  %566 = vmatprep.subr.mxu0 0.0
  %567 = vmatpush1.msra.mxu0 0.0
  %568 = vmatprep.subr.mxu0 0.0
  %569 = vmatpush1.msra.mxu0 0.0
  %570 = vmatprep.subr.mxu0 0.0
  %571 = vmatpush1.msra.mxu0 0.0
  %572 = vmatprep.subr.mxu0 0.0
  %573 = vmatpush1.msra.mxu0 0.0
  %574 = vmatprep.subr.mxu0 0.0
  %575 = vmatpush1.msra.mxu0 0.0
  %576 = vmatprep.subr.mxu0 0.0
  %577 = vmatpush1.msra.mxu0 0.0
  %578 = vmatprep.subr.mxu0 0.0
  %579 = vmatpush1.msra.mxu0 0.0
  %580 = vmatprep.subr.mxu0 0.0
  %581 = vmatpush1.msra.mxu0 0.0
  %582 = vmatprep.subr.mxu0 0.0
  %583 = vmatpush1.msra.mxu0 0.0
  %584 = vmatprep.subr.mxu0 0.0
  %585 = vmatpush1.msra.mxu0 0.0
  %586 = vmatprep.subr.mxu0 0.0
  %587 = vmatpush1.msra.mxu0 0.0
  %588 = vmatprep.subr.mxu0 0.0
  %589 = vmatpush1.msra.mxu0 0.0
  %590 = vmatprep.subr.mxu0 0.0
  %591 = vmatpush1.msra.mxu0 0.0
  %592 = vmatprep.subr.mxu0 0.0
  %593 = vmatpush1.msra.mxu0 0.0
  %594 = vmatprep.subr.mxu0 0.0
  %595 = vmatpush1.msra.mxu0 0.0
  %596 = vmatprep.subr.mxu0 0.0
  %597 = vmatpush1.msra.mxu0 0.0
  %598 = vmatprep.subr.mxu0 0.0
  %599 = vmatpush1.msra.mxu0 0.0
  %600 = vmatprep.subr.mxu0 0.0
  %601 = vmatpush1.msra.mxu0 0.0
  %602 = vmatprep.subr.mxu0 0.0
  %603 = vmatpush1.msra.mxu0 0.0
  %604 = vmatprep.subr.mxu0 0.0
  %605 = vmatpush1.msra.mxu0 0.0
  %606 = vmatprep.subr.mxu0 0.0
  %607 = vmatpush1.msra.mxu0 0.0
  %608 = vmatprep.subr.mxu0 0.0
  %609 = vmatpush1.msra.mxu0 0.0
  %610 = vmatprep.subr.mxu0 0.0
  %611 = vmatpush1.msra.mxu0 0.0
  %612 = vmatprep.subr.mxu0 0.0
  %613 = vmatpush1.msra.mxu0 0.0
  %614 = vmatprep.subr.mxu0 0.0
  %615 = vmatpush1.msra.mxu0 0.0
  %616 = vmatprep.subr.mxu0 0.0
  %617 = vmatpush1.msra.mxu0 0.0
  %618 = vmatprep.mubr.f32.mxu0 0.0
  %619 = vmatmul.mubr.f32.gmra.mrb[0].mxu0 %v552
  %v620 = vpop.f32.mrb[0].mxu0
  %v621 = vadd.f32 %v549, %v620
  %v622 = vpop.f32.mrb[0].mxu0
  %623 = vdwg.mxu0
  %v624 = vmax.f32 %v621, 0.0
  %v626 = vlaneseq
  %v627 = vshrl.u32 %v626, 7
  %v628 = vsub.s32 0, %v627
  %v629 = vrot.slane %v63, %v628
  %v632 = vsel %vm64, %v624, 0
  %634 = vmatprep.subr.mxu0 0.0
  %635 = vmatpush1.msra.mxu0 %v59
  %636 = vmatprep.subr.mxu0 0.0
  %637 = vmatpush1.msra.mxu0 %v60
  %638 = vmatprep.subr.mxu0 0.0
  %639 = vmatpush1.msra.mxu0 %v61
  %640 = vmatprep.subr.mxu0 0.0
  %641 = vmatpush1.msra.mxu0 %v62
  %642 = vmatprep.subr.mxu0 0.0
  %643 = vmatpush1.msra.mxu0 0.0
  %644 = vmatprep.subr.mxu0 0.0
  %645 = vmatpush1.msra.mxu0 0.0
  %646 = vmatprep.subr.mxu0 0.0
  %647 = vmatpush1.msra.mxu0 0.0
  %648 = vmatprep.subr.mxu0 0.0
  %649 = vmatpush1.msra.mxu0 0.0
  %650 = vmatprep.subr.mxu0 0.0
  %651 = vmatpush1.msra.mxu0 0.0
  %652 = vmatprep.subr.mxu0 0.0
  %653 = vmatpush1.msra.mxu0 0.0
  %654 = vmatprep.subr.mxu0 0.0
  %655 = vmatpush1.msra.mxu0 0.0
  %656 = vmatprep.subr.mxu0 0.0
  %657 = vmatpush1.msra.mxu0 0.0
  %658 = vmatprep.subr.mxu0 0.0
  %659 = vmatpush1.msra.mxu0 0.0
  %660 = vmatprep.subr.mxu0 0.0
  %661 = vmatpush1.msra.mxu0 0.0
  %662 = vmatprep.subr.mxu0 0.0
  %663 = vmatpush1.msra.mxu0 0.0
  %664 = vmatprep.subr.mxu0 0.0
  %665 = vmatpush1.msra.mxu0 0.0
  %666 = vmatprep.subr.mxu0 0.0
  %667 = vmatpush1.msra.mxu0 0.0
  %668 = vmatprep.subr.mxu0 0.0
  %669 = vmatpush1.msra.mxu0 0.0
  %670 = vmatprep.subr.mxu0 0.0
  %671 = vmatpush1.msra.mxu0 0.0
  %672 = vmatprep.subr.mxu0 0.0
  %673 = vmatpush1.msra.mxu0 0.0
  %674 = vmatprep.subr.mxu0 0.0
  %675 = vmatpush1.msra.mxu0 0.0
  %676 = vmatprep.subr.mxu0 0.0
  %677 = vmatpush1.msra.mxu0 0.0
  %678 = vmatprep.subr.mxu0 0.0
  %679 = vmatpush1.msra.mxu0 0.0
  %680 = vmatprep.subr.mxu0 0.0
  %681 = vmatpush1.msra.mxu0 0.0
  %682 = vmatprep.subr.mxu0 0.0
  %683 = vmatpush1.msra.mxu0 0.0
  %684 = vmatprep.subr.mxu0 0.0
  %685 = vmatpush1.msra.mxu0 0.0
  %686 = vmatprep.subr.mxu0 0.0
  %687 = vmatpush1.msra.mxu0 0.0
  %688 = vmatprep.subr.mxu0 0.0
  %689 = vmatpush1.msra.mxu0 0.0
  %690 = vmatprep.subr.mxu0 0.0
  %691 = vmatpush1.msra.mxu0 0.0
  %692 = vmatprep.subr.mxu0 0.0
  %693 = vmatpush1.msra.mxu0 0.0
  %694 = vmatprep.subr.mxu0 0.0
  %695 = vmatpush1.msra.mxu0 0.0
  %696 = vmatprep.subr.mxu0 0.0
  %697 = vmatpush1.msra.mxu0 0.0
  %698 = vmatprep.mubr.f32.mxu0 0.0
  %699 = vmatmul.mubr.f32.gmra.mrb[0].mxu0 %v632
  %v700 = vpop.f32.mrb[0].mxu0
  %v701 = vadd.f32 %v629, %v700
  %v702 = vpop.f32.mrb[0].mxu0
  %703 = vdwg.mxu0
  %vm704 = vcmask 257024
  %705 = vst.msk [vmem:[%s10] sm:$0xf] %vm704, %v701
  // Predicated region
  $region42: #{sim_attention_3_forward.7} parent=0 // pred_check
    _
  $region43: #{sim_attention_3_forward.7} parent=0 // pred_check_branch
    %707 = sbr.rel (0) target = $region45
  $region44: #{sim_attention_3_forward.7} parent=0 // pred_region
    _
  $region45: #{sim_attention_3_forward.7} parent=0 // pred_fallthru
    _
  // Predicated region
  $region46: #{sim_attention_3_forward.7} parent=0 // pred_check
    _
  $region47: #{sim_attention_3_forward.7} parent=0 // pred_check_branch
    %709 = sbr.rel (0) target = $region49
  $region48: #{sim_attention_3_forward.7} parent=0 // pred_region
    _
  $region49: #{sim_attention_3_forward.7} parent=0 // pred_fallthru
    _

</llo_original>
